<compile_context>
chip_gen: v7x
topology: tpu7x:2x2x1
jax: 0.10.0
libtpu: 0.0.40
codegen_flags: <defaults>
</compile_context>

<pallas_src>
import functools

import jax
import jax.numpy as jnp
from jax.experimental import pallas as pl
from jax.experimental.pallas import tpu as pltpu


def _round_up(n, m):
    return ((n + m - 1) // m) * m


def lstm_kernel(seq_length, num_hidden_padded,
                x_ref, wx_ref, wh_ref, wph_ref, b4_ref, bp_ref,
                out_ref):
    B = x_ref.shape[0]
    H = num_hidden_padded

    wx = wx_ref[...]                                   # (1, 4H)
    wh = wh_ref[...]                                   # (H, 4H)
    # Hoist the bias broadcast out of the recurrence (JAX does not CSE broadcasts).
    b4 = jnp.broadcast_to(b4_ref[...], (B, 4 * H))     # (B, 4H)

    # Input projection has no sequential dependence (input_dim == 1 -> pure VPU
    # broadcast-multiply).  Precompute it with the gate bias folded in, so it is
    # off the serial critical path.
    xproj = [x_ref[:, t:t + 1] * wx + b4 for t in range(seq_length - 1)]

    h = jnp.zeros((B, H), jnp.float32)                 # ht_1 (transposed vs. PyTorch (H, B))
    c = jnp.zeros((B, H), jnp.float32)                 # ct_1

    # NOTE: the reference module only iterates seq_length - 1 steps (the last
    # token is never consumed) -- reproduced exactly.  T is tiny and static, so
    # a Python unroll is fine; for large T switch to lax.fori_loop(..., unroll=k)
    # to bound vreg live ranges.
    for t in range(seq_length - 1):
        pre = xproj[t] + jnp.dot(h, wh, preferred_element_type=jnp.float32)   # (B, 4H)

        # Each gate slice is exactly one 128-lane tile (H_pad == 128).
        g = jnp.tanh(pre[:, 0 * H:1 * H])
        i = jax.nn.sigmoid(pre[:, 1 * H:2 * H])
        f = jax.nn.sigmoid(pre[:, 2 * H:3 * H])
        o = jax.nn.sigmoid(pre[:, 3 * H:4 * H])

        c = g * i + c * f
        h = jnp.tanh(c) * o

    # p_t = W_ph @ h_t + b_p[:, None]  ->  returned transposed, lane-dense store.
    out_ref[...] = (jnp.dot(h, wph_ref[...], preferred_element_type=jnp.float32)
                    + bp_ref[...])


def _pad_gate_rows(w, H, H_pad):
    """(4H, K) -> (4*H_pad, K), zero-padding each gate block independently."""
    K = w.shape[1]
    w4 = w.reshape(4, H, K)
    w4 = jnp.pad(w4, ((0, 0), (0, H_pad - H), (0, 0)))
    return w4.reshape(4 * H_pad, K)


def lstm_forward(x, params, *, seq_length, num_hidden, num_classes):
    """x: (B, seq_length) float32. Returns (B, num_classes) float32."""
    B, _ = x.shape
    H, C = num_hidden, num_classes
    assert params["W_x"].shape[1] == 1, "palindrome LSTM consumes scalar tokens (input_dim == 1)"

    # Tile-aligned padded sizes: sublane (8) on batch, lane (128) on feature dims.
    B_pad = _round_up(max(B, 8), 8)
    H_pad = _round_up(H, 128)
    C_pad = _round_up(C, 128)

    # ---- weight / bias prep (zero padding is value-preserving) -------------
    wx_t = _pad_gate_rows(params["W_x"], H, H_pad).T                      # (1, 4*H_pad)
    wh_cols = jnp.pad(params["W_h"], ((0, 0), (0, H_pad - H)))            # (4H, H_pad)
    wh_t = _pad_gate_rows(wh_cols, H, H_pad).T                            # (H_pad, 4*H_pad)
    wph_t = jnp.pad(params["W_ph"], ((0, C_pad - C), (0, H_pad - H))).T   # (H_pad, C_pad)

    pad_h = lambda b: jnp.pad(b, (0, H_pad - H))
    b4 = jnp.concatenate([pad_h(params["bg"]), pad_h(params["bi"]),
                          pad_h(params["bf"]), pad_h(params["bo"])])[None, :]   # (1, 4*H_pad)
    bp = jnp.pad(params["b_p"], (0, C_pad - C))[None, :]                        # (1, C_pad)

    x_pad = jnp.pad(x.astype(jnp.float32), ((0, B_pad - B), (0, 0)))            # (B_pad, T)

    kernel = functools.partial(lstm_kernel, seq_length, H_pad)
    vmem = lambda: pl.BlockSpec(memory_space=pltpu.MemorySpace.VMEM)

    out_pad = pl.pallas_call(
        kernel,
        out_shape=jax.ShapeDtypeStruct((B_pad, C_pad), jnp.float32),
        in_specs=[vmem() for _ in range(6)],
        out_specs=vmem(),
    )(x_pad, wx_t, wh_t, wph_t, b4, bp)

    return out_pad[:B, :C]


def lstm_reference(x, params, *, seq_length):
    """Pure-JAX reference matching the PyTorch forward (transposed layout)."""
    H = params["bg"].shape[0]
    B = x.shape[0]
    h = jnp.zeros((B, H), jnp.float32)
    c = jnp.zeros((B, H), jnp.float32)
    wx_t = params["W_x"].T
    wh_t = params["W_h"].T
    for t in range(seq_length - 1):
        pre = x[:, t:t + 1] @ wx_t + h @ wh_t
        g = jnp.tanh(pre[:, 0 * H:1 * H] + params["bg"])
        i = jax.nn.sigmoid(pre[:, 1 * H:2 * H] + params["bi"])
        f = jax.nn.sigmoid(pre[:, 2 * H:3 * H] + params["bf"])
        o = jax.nn.sigmoid(pre[:, 3 * H:4 * H] + params["bo"])
        c = g * i + c * f
        h = jnp.tanh(c) * o
    return h @ params["W_ph"].T + params["b_p"][None, :]


def init_params(key, *, input_dim, num_hidden, num_classes):
    """Deterministic N(0, 0.01) init matching the PyTorch module's shapes."""
    ks = jax.random.split(key, 8)
    std = 0.01
    return {
        "W_x":  jax.random.normal(ks[0], (4 * num_hidden, input_dim), jnp.float32) * std,
        "W_h":  jax.random.normal(ks[1], (4 * num_hidden, num_hidden), jnp.float32) * std,
        "W_ph": jax.random.normal(ks[2], (num_classes, num_hidden), jnp.float32) * std,
        "b_p":  jax.random.normal(ks[3], (num_classes,), jnp.float32) * std,
        "bg":   jax.random.normal(ks[4], (num_hidden,), jnp.float32) * std,
        "bi":   jax.random.normal(ks[5], (num_hidden,), jnp.float32) * std,
        "bf":   jax.random.normal(ks[6], (num_hidden,), jnp.float32) * std,
        "bo":   jax.random.normal(ks[7], (num_hidden,), jnp.float32) * std,
    }


if __name__ == "__main__":
    seq_length = 8
    input_dim = 1          # x[:, i] is a scalar per batch element in the reference
    num_hidden = 32
    num_classes = 10
    batch_size = 2

    key = jax.random.PRNGKey(0)
    pkey, xkey = jax.random.split(key)

    params = init_params(pkey, input_dim=input_dim,
                         num_hidden=num_hidden, num_classes=num_classes)

    # palindrome-style digit sequence, cast to float (as the PyTorch model consumes it)
    x = jax.random.randint(xkey, (batch_size, seq_length), 0, 10).astype(jnp.float32)

    out = lstm_forward(x, params, seq_length=seq_length,
                       num_hidden=num_hidden, num_classes=num_classes)
    out = jax.block_until_ready(out)

    assert out.shape == (batch_size, num_classes)
    assert out.dtype == jnp.float32

    ref = jax.block_until_ready(lstm_reference(x, params, seq_length=seq_length))
    assert jnp.allclose(out, ref, rtol=2e-2, atol=1e-4), "kernel mismatch vs. reference"

    print("KERNEL_OK")
</pallas_src>

<mosaic_0001>
module attributes {stable_mosaic.version = 11 : i64} {
  func.func @lstm_kernel(%arg0: memref<8x8xf32, #tpu.memory_space<vmem>>, %arg1: memref<1x512xf32, #tpu.memory_space<vmem>>, %arg2: memref<128x512xf32, #tpu.memory_space<vmem>>, %arg3: memref<128x128xf32, #tpu.memory_space<vmem>>, %arg4: memref<1x512xf32, #tpu.memory_space<vmem>>, %arg5: memref<1x128xf32, #tpu.memory_space<vmem>>, %arg6: memref<8x128xf32, #tpu.memory_space<vmem>>) attributes {dimension_semantics = [], scalar_prefetch = 0 : i64, scratch_operands = 0 : i64, tpu.core_type = #tpu.core_type<tc>} {
    %c0 = arith.constant 0 : index
    %c0_0 = arith.constant 0 : index
    %0 = vector.load %arg1[%c0, %c0_0] : memref<1x512xf32, #tpu.memory_space<vmem>>, vector<1x512xf32>
    %c0_1 = arith.constant 0 : index
    %c0_2 = arith.constant 0 : index
    %1 = vector.load %arg2[%c0_1, %c0_2] : memref<128x512xf32, #tpu.memory_space<vmem>>, vector<128x512xf32>
    %c0_3 = arith.constant 0 : index
    %c0_4 = arith.constant 0 : index
    %2 = vector.load %arg4[%c0_3, %c0_4] : memref<1x512xf32, #tpu.memory_space<vmem>>, vector<1x512xf32>
    %3 = vector.shape_cast %2 : vector<1x512xf32> to vector<1x512xf32>
    %4 = vector.broadcast %3 : vector<1x512xf32> to vector<8x512xf32>
    %c0_5 = arith.constant 0 : index
    %c0_6 = arith.constant 0 : index
    %5 = vector.load %arg0[%c0_5, %c0_6] : memref<8x8xf32, #tpu.memory_space<vmem>>, vector<8x1xf32>
    %6 = vector.broadcast %5 : vector<8x1xf32> to vector<8x512xf32>
    %7 = vector.broadcast %0 : vector<1x512xf32> to vector<8x512xf32>
    %8 = arith.mulf %6, %7 : vector<8x512xf32>
    %9 = arith.addf %8, %4 : vector<8x512xf32>
    %c0_7 = arith.constant 0 : index
    %c1 = arith.constant 1 : index
    %10 = vector.load %arg0[%c0_7, %c1] : memref<8x8xf32, #tpu.memory_space<vmem>>, vector<8x1xf32>
    %11 = vector.broadcast %10 : vector<8x1xf32> to vector<8x512xf32>
    %12 = vector.broadcast %0 : vector<1x512xf32> to vector<8x512xf32>
    %13 = arith.mulf %11, %12 : vector<8x512xf32>
    %14 = arith.addf %13, %4 : vector<8x512xf32>
    %c0_8 = arith.constant 0 : index
    %c2 = arith.constant 2 : index
    %15 = vector.load %arg0[%c0_8, %c2] : memref<8x8xf32, #tpu.memory_space<vmem>>, vector<8x1xf32>
    %16 = vector.broadcast %15 : vector<8x1xf32> to vector<8x512xf32>
    %17 = vector.broadcast %0 : vector<1x512xf32> to vector<8x512xf32>
    %18 = arith.mulf %16, %17 : vector<8x512xf32>
    %19 = arith.addf %18, %4 : vector<8x512xf32>
    %c0_9 = arith.constant 0 : index
    %c3 = arith.constant 3 : index
    %20 = vector.load %arg0[%c0_9, %c3] : memref<8x8xf32, #tpu.memory_space<vmem>>, vector<8x1xf32>
    %21 = vector.broadcast %20 : vector<8x1xf32> to vector<8x512xf32>
    %22 = vector.broadcast %0 : vector<1x512xf32> to vector<8x512xf32>
    %23 = arith.mulf %21, %22 : vector<8x512xf32>
    %24 = arith.addf %23, %4 : vector<8x512xf32>
    %c0_10 = arith.constant 0 : index
    %c4 = arith.constant 4 : index
    %25 = vector.load %arg0[%c0_10, %c4] : memref<8x8xf32, #tpu.memory_space<vmem>>, vector<8x1xf32>
    %26 = vector.broadcast %25 : vector<8x1xf32> to vector<8x512xf32>
    %27 = vector.broadcast %0 : vector<1x512xf32> to vector<8x512xf32>
    %28 = arith.mulf %26, %27 : vector<8x512xf32>
    %29 = arith.addf %28, %4 : vector<8x512xf32>
    %c0_11 = arith.constant 0 : index
    %c5 = arith.constant 5 : index
    %30 = vector.load %arg0[%c0_11, %c5] : memref<8x8xf32, #tpu.memory_space<vmem>>, vector<8x1xf32>
    %31 = vector.broadcast %30 : vector<8x1xf32> to vector<8x512xf32>
    %32 = vector.broadcast %0 : vector<1x512xf32> to vector<8x512xf32>
    %33 = arith.mulf %31, %32 : vector<8x512xf32>
    %34 = arith.addf %33, %4 : vector<8x512xf32>
    %c0_12 = arith.constant 0 : index
    %c6 = arith.constant 6 : index
    %35 = vector.load %arg0[%c0_12, %c6] : memref<8x8xf32, #tpu.memory_space<vmem>>, vector<8x1xf32>
    %36 = vector.broadcast %35 : vector<8x1xf32> to vector<8x512xf32>
    %37 = vector.broadcast %0 : vector<1x512xf32> to vector<8x512xf32>
    %38 = arith.mulf %36, %37 : vector<8x512xf32>
    %39 = arith.addf %38, %4 : vector<8x512xf32>
    %cst = arith.constant 0.000000e+00 : f32
    %40 = vector.broadcast %cst : f32 to vector<8x128xf32>
    %cst_13 = arith.constant 0.000000e+00 : f32
    %41 = vector.broadcast %cst_13 : f32 to vector<8x128xf32>
    %cst_14 = arith.constant dense<0.000000e+00> : vector<8x512xf32>
    %42 = tpu.matmul %40, %1, %cst_14 {dimension_numbers = #tpu.dot_dimension_numbers<[1], [0], [0], [1], [0, 0, 1, 1], [], []>} : vector<8x128xf32>, vector<128x512xf32>, vector<8x512xf32> -> vector<8x512xf32>
    %43 = arith.addf %9, %42 : vector<8x512xf32>
    %44 = vector.extract_strided_slice %43 {offsets = [0, 0], sizes = [8, 128], strides = [1, 1]} : vector<8x512xf32> to vector<8x128xf32>
    %45 = math.tanh %44 : vector<8x128xf32>
    %46 = vector.extract_strided_slice %43 {offsets = [0, 128], sizes = [8, 128], strides = [1, 1]} : vector<8x512xf32> to vector<8x128xf32>
    %47 = arith.negf %46 : vector<8x128xf32>
    %48 = math.exp %47 : vector<8x128xf32>
    %cst_15 = arith.constant 1.000000e+00 : f32
    %49 = vector.broadcast %cst_15 : f32 to vector<8x128xf32>
    %50 = arith.addf %49, %48 : vector<8x128xf32>
    %51 = arith.divf %49, %50 : vector<8x128xf32>
    %52 = vector.extract_strided_slice %43 {offsets = [0, 256], sizes = [8, 128], strides = [1, 1]} : vector<8x512xf32> to vector<8x128xf32>
    %53 = arith.negf %52 : vector<8x128xf32>
    %54 = math.exp %53 : vector<8x128xf32>
    %cst_16 = arith.constant 1.000000e+00 : f32
    %55 = vector.broadcast %cst_16 : f32 to vector<8x128xf32>
    %56 = arith.addf %55, %54 : vector<8x128xf32>
    %57 = arith.divf %55, %56 : vector<8x128xf32>
    %58 = vector.extract_strided_slice %43 {offsets = [0, 384], sizes = [8, 128], strides = [1, 1]} : vector<8x512xf32> to vector<8x128xf32>
    %59 = arith.negf %58 : vector<8x128xf32>
    %60 = math.exp %59 : vector<8x128xf32>
    %cst_17 = arith.constant 1.000000e+00 : f32
    %61 = vector.broadcast %cst_17 : f32 to vector<8x128xf32>
    %62 = arith.addf %61, %60 : vector<8x128xf32>
    %63 = arith.divf %61, %62 : vector<8x128xf32>
    %64 = arith.mulf %45, %51 : vector<8x128xf32>
    %65 = arith.mulf %41, %57 : vector<8x128xf32>
    %66 = arith.addf %64, %65 : vector<8x128xf32>
    %67 = math.tanh %66 : vector<8x128xf32>
    %68 = arith.mulf %67, %63 : vector<8x128xf32>
    %cst_18 = arith.constant dense<0.000000e+00> : vector<8x512xf32>
    %69 = tpu.matmul %68, %1, %cst_18 {dimension_numbers = #tpu.dot_dimension_numbers<[1], [0], [0], [1], [0, 0, 1, 1], [], []>} : vector<8x128xf32>, vector<128x512xf32>, vector<8x512xf32> -> vector<8x512xf32>
    %70 = arith.addf %14, %69 : vector<8x512xf32>
    %71 = vector.extract_strided_slice %70 {offsets = [0, 0], sizes = [8, 128], strides = [1, 1]} : vector<8x512xf32> to vector<8x128xf32>
    %72 = math.tanh %71 : vector<8x128xf32>
    %73 = vector.extract_strided_slice %70 {offsets = [0, 128], sizes = [8, 128], strides = [1, 1]} : vector<8x512xf32> to vector<8x128xf32>
    %74 = arith.negf %73 : vector<8x128xf32>
    %75 = math.exp %74 : vector<8x128xf32>
    %cst_19 = arith.constant 1.000000e+00 : f32
    %76 = vector.broadcast %cst_19 : f32 to vector<8x128xf32>
    %77 = arith.addf %76, %75 : vector<8x128xf32>
    %78 = arith.divf %76, %77 : vector<8x128xf32>
    %79 = vector.extract_strided_slice %70 {offsets = [0, 256], sizes = [8, 128], strides = [1, 1]} : vector<8x512xf32> to vector<8x128xf32>
    %80 = arith.negf %79 : vector<8x128xf32>
    %81 = math.exp %80 : vector<8x128xf32>
    %cst_20 = arith.constant 1.000000e+00 : f32
    %82 = vector.broadcast %cst_20 : f32 to vector<8x128xf32>
    %83 = arith.addf %82, %81 : vector<8x128xf32>
    %84 = arith.divf %82, %83 : vector<8x128xf32>
    %85 = vector.extract_strided_slice %70 {offsets = [0, 384], sizes = [8, 128], strides = [1, 1]} : vector<8x512xf32> to vector<8x128xf32>
    %86 = arith.negf %85 : vector<8x128xf32>
    %87 = math.exp %86 : vector<8x128xf32>
    %cst_21 = arith.constant 1.000000e+00 : f32
    %88 = vector.broadcast %cst_21 : f32 to vector<8x128xf32>
    %89 = arith.addf %88, %87 : vector<8x128xf32>
    %90 = arith.divf %88, %89 : vector<8x128xf32>
    %91 = arith.mulf %72, %78 : vector<8x128xf32>
    %92 = arith.mulf %66, %84 : vector<8x128xf32>
    %93 = arith.addf %91, %92 : vector<8x128xf32>
    %94 = math.tanh %93 : vector<8x128xf32>
    %95 = arith.mulf %94, %90 : vector<8x128xf32>
    %cst_22 = arith.constant dense<0.000000e+00> : vector<8x512xf32>
    %96 = tpu.matmul %95, %1, %cst_22 {dimension_numbers = #tpu.dot_dimension_numbers<[1], [0], [0], [1], [0, 0, 1, 1], [], []>} : vector<8x128xf32>, vector<128x512xf32>, vector<8x512xf32> -> vector<8x512xf32>
    %97 = arith.addf %19, %96 : vector<8x512xf32>
    %98 = vector.extract_strided_slice %97 {offsets = [0, 0], sizes = [8, 128], strides = [1, 1]} : vector<8x512xf32> to vector<8x128xf32>
    %99 = math.tanh %98 : vector<8x128xf32>
    %100 = vector.extract_strided_slice %97 {offsets = [0, 128], sizes = [8, 128], strides = [1, 1]} : vector<8x512xf32> to vector<8x128xf32>
    %101 = arith.negf %100 : vector<8x128xf32>
    %102 = math.exp %101 : vector<8x128xf32>
    %cst_23 = arith.constant 1.000000e+00 : f32
    %103 = vector.broadcast %cst_23 : f32 to vector<8x128xf32>
    %104 = arith.addf %103, %102 : vector<8x128xf32>
    %105 = arith.divf %103, %104 : vector<8x128xf32>
    %106 = vector.extract_strided_slice %97 {offsets = [0, 256], sizes = [8, 128], strides = [1, 1]} : vector<8x512xf32> to vector<8x128xf32>
    %107 = arith.negf %106 : vector<8x128xf32>
    %108 = math.exp %107 : vector<8x128xf32>
    %cst_24 = arith.constant 1.000000e+00 : f32
    %109 = vector.broadcast %cst_24 : f32 to vector<8x128xf32>
    %110 = arith.addf %109, %108 : vector<8x128xf32>
    %111 = arith.divf %109, %110 : vector<8x128xf32>
    %112 = vector.extract_strided_slice %97 {offsets = [0, 384], sizes = [8, 128], strides = [1, 1]} : vector<8x512xf32> to vector<8x128xf32>
    %113 = arith.negf %112 : vector<8x128xf32>
    %114 = math.exp %113 : vector<8x128xf32>
    %cst_25 = arith.constant 1.000000e+00 : f32
    %115 = vector.broadcast %cst_25 : f32 to vector<8x128xf32>
    %116 = arith.addf %115, %114 : vector<8x128xf32>
    %117 = arith.divf %115, %116 : vector<8x128xf32>
    %118 = arith.mulf %99, %105 : vector<8x128xf32>
    %119 = arith.mulf %93, %111 : vector<8x128xf32>
    %120 = arith.addf %118, %119 : vector<8x128xf32>
    %121 = math.tanh %120 : vector<8x128xf32>
    %122 = arith.mulf %121, %117 : vector<8x128xf32>
    %cst_26 = arith.constant dense<0.000000e+00> : vector<8x512xf32>
    %123 = tpu.matmul %122, %1, %cst_26 {dimension_numbers = #tpu.dot_dimension_numbers<[1], [0], [0], [1], [0, 0, 1, 1], [], []>} : vector<8x128xf32>, vector<128x512xf32>, vector<8x512xf32> -> vector<8x512xf32>
    %124 = arith.addf %24, %123 : vector<8x512xf32>
    %125 = vector.extract_strided_slice %124 {offsets = [0, 0], sizes = [8, 128], strides = [1, 1]} : vector<8x512xf32> to vector<8x128xf32>
    %126 = math.tanh %125 : vector<8x128xf32>
    %127 = vector.extract_strided_slice %124 {offsets = [0, 128], sizes = [8, 128], strides = [1, 1]} : vector<8x512xf32> to vector<8x128xf32>
    %128 = arith.negf %127 : vector<8x128xf32>
    %129 = math.exp %128 : vector<8x128xf32>
    %cst_27 = arith.constant 1.000000e+00 : f32
    %130 = vector.broadcast %cst_27 : f32 to vector<8x128xf32>
    %131 = arith.addf %130, %129 : vector<8x128xf32>
    %132 = arith.divf %130, %131 : vector<8x128xf32>
    %133 = vector.extract_strided_slice %124 {offsets = [0, 256], sizes = [8, 128], strides = [1, 1]} : vector<8x512xf32> to vector<8x128xf32>
    %134 = arith.negf %133 : vector<8x128xf32>
    %135 = math.exp %134 : vector<8x128xf32>
    %cst_28 = arith.constant 1.000000e+00 : f32
    %136 = vector.broadcast %cst_28 : f32 to vector<8x128xf32>
    %137 = arith.addf %136, %135 : vector<8x128xf32>
    %138 = arith.divf %136, %137 : vector<8x128xf32>
    %139 = vector.extract_strided_slice %124 {offsets = [0, 384], sizes = [8, 128], strides = [1, 1]} : vector<8x512xf32> to vector<8x128xf32>
    %140 = arith.negf %139 : vector<8x128xf32>
    %141 = math.exp %140 : vector<8x128xf32>
    %cst_29 = arith.constant 1.000000e+00 : f32
    %142 = vector.broadcast %cst_29 : f32 to vector<8x128xf32>
    %143 = arith.addf %142, %141 : vector<8x128xf32>
    %144 = arith.divf %142, %143 : vector<8x128xf32>
    %145 = arith.mulf %126, %132 : vector<8x128xf32>
    %146 = arith.mulf %120, %138 : vector<8x128xf32>
    %147 = arith.addf %145, %146 : vector<8x128xf32>
    %148 = math.tanh %147 : vector<8x128xf32>
    %149 = arith.mulf %148, %144 : vector<8x128xf32>
    %cst_30 = arith.constant dense<0.000000e+00> : vector<8x512xf32>
    %150 = tpu.matmul %149, %1, %cst_30 {dimension_numbers = #tpu.dot_dimension_numbers<[1], [0], [0], [1], [0, 0, 1, 1], [], []>} : vector<8x128xf32>, vector<128x512xf32>, vector<8x512xf32> -> vector<8x512xf32>
    %151 = arith.addf %29, %150 : vector<8x512xf32>
    %152 = vector.extract_strided_slice %151 {offsets = [0, 0], sizes = [8, 128], strides = [1, 1]} : vector<8x512xf32> to vector<8x128xf32>
    %153 = math.tanh %152 : vector<8x128xf32>
    %154 = vector.extract_strided_slice %151 {offsets = [0, 128], sizes = [8, 128], strides = [1, 1]} : vector<8x512xf32> to vector<8x128xf32>
    %155 = arith.negf %154 : vector<8x128xf32>
    %156 = math.exp %155 : vector<8x128xf32>
    %cst_31 = arith.constant 1.000000e+00 : f32
    %157 = vector.broadcast %cst_31 : f32 to vector<8x128xf32>
    %158 = arith.addf %157, %156 : vector<8x128xf32>
    %159 = arith.divf %157, %158 : vector<8x128xf32>
    %160 = vector.extract_strided_slice %151 {offsets = [0, 256], sizes = [8, 128], strides = [1, 1]} : vector<8x512xf32> to vector<8x128xf32>
    %161 = arith.negf %160 : vector<8x128xf32>
    %162 = math.exp %161 : vector<8x128xf32>
    %cst_32 = arith.constant 1.000000e+00 : f32
    %163 = vector.broadcast %cst_32 : f32 to vector<8x128xf32>
    %164 = arith.addf %163, %162 : vector<8x128xf32>
    %165 = arith.divf %163, %164 : vector<8x128xf32>
    %166 = vector.extract_strided_slice %151 {offsets = [0, 384], sizes = [8, 128], strides = [1, 1]} : vector<8x512xf32> to vector<8x128xf32>
    %167 = arith.negf %166 : vector<8x128xf32>
    %168 = math.exp %167 : vector<8x128xf32>
    %cst_33 = arith.constant 1.000000e+00 : f32
    %169 = vector.broadcast %cst_33 : f32 to vector<8x128xf32>
    %170 = arith.addf %169, %168 : vector<8x128xf32>
    %171 = arith.divf %169, %170 : vector<8x128xf32>
    %172 = arith.mulf %153, %159 : vector<8x128xf32>
    %173 = arith.mulf %147, %165 : vector<8x128xf32>
    %174 = arith.addf %172, %173 : vector<8x128xf32>
    %175 = math.tanh %174 : vector<8x128xf32>
    %176 = arith.mulf %175, %171 : vector<8x128xf32>
    %cst_34 = arith.constant dense<0.000000e+00> : vector<8x512xf32>
    %177 = tpu.matmul %176, %1, %cst_34 {dimension_numbers = #tpu.dot_dimension_numbers<[1], [0], [0], [1], [0, 0, 1, 1], [], []>} : vector<8x128xf32>, vector<128x512xf32>, vector<8x512xf32> -> vector<8x512xf32>
    %178 = arith.addf %34, %177 : vector<8x512xf32>
    %179 = vector.extract_strided_slice %178 {offsets = [0, 0], sizes = [8, 128], strides = [1, 1]} : vector<8x512xf32> to vector<8x128xf32>
    %180 = math.tanh %179 : vector<8x128xf32>
    %181 = vector.extract_strided_slice %178 {offsets = [0, 128], sizes = [8, 128], strides = [1, 1]} : vector<8x512xf32> to vector<8x128xf32>
    %182 = arith.negf %181 : vector<8x128xf32>
    %183 = math.exp %182 : vector<8x128xf32>
    %cst_35 = arith.constant 1.000000e+00 : f32
    %184 = vector.broadcast %cst_35 : f32 to vector<8x128xf32>
    %185 = arith.addf %184, %183 : vector<8x128xf32>
    %186 = arith.divf %184, %185 : vector<8x128xf32>
    %187 = vector.extract_strided_slice %178 {offsets = [0, 256], sizes = [8, 128], strides = [1, 1]} : vector<8x512xf32> to vector<8x128xf32>
    %188 = arith.negf %187 : vector<8x128xf32>
    %189 = math.exp %188 : vector<8x128xf32>
    %cst_36 = arith.constant 1.000000e+00 : f32
    %190 = vector.broadcast %cst_36 : f32 to vector<8x128xf32>
    %191 = arith.addf %190, %189 : vector<8x128xf32>
    %192 = arith.divf %190, %191 : vector<8x128xf32>
    %193 = vector.extract_strided_slice %178 {offsets = [0, 384], sizes = [8, 128], strides = [1, 1]} : vector<8x512xf32> to vector<8x128xf32>
    %194 = arith.negf %193 : vector<8x128xf32>
    %195 = math.exp %194 : vector<8x128xf32>
    %cst_37 = arith.constant 1.000000e+00 : f32
    %196 = vector.broadcast %cst_37 : f32 to vector<8x128xf32>
    %197 = arith.addf %196, %195 : vector<8x128xf32>
    %198 = arith.divf %196, %197 : vector<8x128xf32>
    %199 = arith.mulf %180, %186 : vector<8x128xf32>
    %200 = arith.mulf %174, %192 : vector<8x128xf32>
    %201 = arith.addf %199, %200 : vector<8x128xf32>
    %202 = math.tanh %201 : vector<8x128xf32>
    %203 = arith.mulf %202, %198 : vector<8x128xf32>
    %cst_38 = arith.constant dense<0.000000e+00> : vector<8x512xf32>
    %204 = tpu.matmul %203, %1, %cst_38 {dimension_numbers = #tpu.dot_dimension_numbers<[1], [0], [0], [1], [0, 0, 1, 1], [], []>} : vector<8x128xf32>, vector<128x512xf32>, vector<8x512xf32> -> vector<8x512xf32>
    %205 = arith.addf %39, %204 : vector<8x512xf32>
    %206 = vector.extract_strided_slice %205 {offsets = [0, 0], sizes = [8, 128], strides = [1, 1]} : vector<8x512xf32> to vector<8x128xf32>
    %207 = math.tanh %206 : vector<8x128xf32>
    %208 = vector.extract_strided_slice %205 {offsets = [0, 128], sizes = [8, 128], strides = [1, 1]} : vector<8x512xf32> to vector<8x128xf32>
    %209 = arith.negf %208 : vector<8x128xf32>
    %210 = math.exp %209 : vector<8x128xf32>
    %cst_39 = arith.constant 1.000000e+00 : f32
    %211 = vector.broadcast %cst_39 : f32 to vector<8x128xf32>
    %212 = arith.addf %211, %210 : vector<8x128xf32>
    %213 = arith.divf %211, %212 : vector<8x128xf32>
    %214 = vector.extract_strided_slice %205 {offsets = [0, 256], sizes = [8, 128], strides = [1, 1]} : vector<8x512xf32> to vector<8x128xf32>
    %215 = arith.negf %214 : vector<8x128xf32>
    %216 = math.exp %215 : vector<8x128xf32>
    %cst_40 = arith.constant 1.000000e+00 : f32
    %217 = vector.broadcast %cst_40 : f32 to vector<8x128xf32>
    %218 = arith.addf %217, %216 : vector<8x128xf32>
    %219 = arith.divf %217, %218 : vector<8x128xf32>
    %220 = vector.extract_strided_slice %205 {offsets = [0, 384], sizes = [8, 128], strides = [1, 1]} : vector<8x512xf32> to vector<8x128xf32>
    %221 = arith.negf %220 : vector<8x128xf32>
    %222 = math.exp %221 : vector<8x128xf32>
    %cst_41 = arith.constant 1.000000e+00 : f32
    %223 = vector.broadcast %cst_41 : f32 to vector<8x128xf32>
    %224 = arith.addf %223, %222 : vector<8x128xf32>
    %225 = arith.divf %223, %224 : vector<8x128xf32>
    %226 = arith.mulf %207, %213 : vector<8x128xf32>
    %227 = arith.mulf %201, %219 : vector<8x128xf32>
    %228 = arith.addf %226, %227 : vector<8x128xf32>
    %229 = math.tanh %228 : vector<8x128xf32>
    %230 = arith.mulf %229, %225 : vector<8x128xf32>
    %c0_42 = arith.constant 0 : index
    %c0_43 = arith.constant 0 : index
    %231 = vector.load %arg3[%c0_42, %c0_43] : memref<128x128xf32, #tpu.memory_space<vmem>>, vector<128x128xf32>
    %cst_44 = arith.constant dense<0.000000e+00> : vector<8x128xf32>
    %232 = tpu.matmul %230, %231, %cst_44 {dimension_numbers = #tpu.dot_dimension_numbers<[1], [0], [0], [1], [0, 0, 1, 1], [], []>} : vector<8x128xf32>, vector<128x128xf32>, vector<8x128xf32> -> vector<8x128xf32>
    %c0_45 = arith.constant 0 : index
    %c0_46 = arith.constant 0 : index
    %233 = vector.load %arg5[%c0_45, %c0_46] : memref<1x128xf32, #tpu.memory_space<vmem>>, vector<1x128xf32>
    %234 = vector.broadcast %233 : vector<1x128xf32> to vector<8x128xf32>
    %235 = arith.addf %232, %234 : vector<8x128xf32>
    %c0_47 = arith.constant 0 : index
    %c0_48 = arith.constant 0 : index
    %236 = vector.load %arg6[%c0_47, %c0_48] : memref<8x128xf32, #tpu.memory_space<vmem>>, vector<8x128xf32>
    tpu.vector_store %arg6[%c0_47, %c0_48], %235 {strides = array<i32>} : memref<8x128xf32, #tpu.memory_space<vmem>>, vector<8x128xf32>,
    return
  }
}

</mosaic_0001>

<llo_original>
// kernel: tpu_custom_call.1
$region0: #{tpu_custom_call.1}
  #allocation0 [shape = 'u32[]', space=smem, size = 0x4, offset = 0x4, fixed_abs, tag = 'smem constant byte address 0x4 - core index']
  #allocation1 [shape = 'u32[144,128]{1,0:T(1,128)}', space=vmem, size = 0x12000, scoped, tag = 'internal scratch']
  %s0 = inlined_call_operand.hbm [shape: f32[8,8], index: 0, kind: input, shape index: {}]
  %s1 = inlined_call_operand.hbm [shape: f32[1,512], index: 1, kind: input, shape index: {}]
  %s2 = inlined_call_operand.hbm [shape: f32[128,512], index: 2, kind: input, shape index: {}]
  %s3 = inlined_call_operand.hbm [shape: f32[128,128], index: 3, kind: input, shape index: {}]
  %s4 = inlined_call_operand.vmem [shape: f32[1,512], index: 4, kind: input, shape index: {}]
  %s5 = inlined_call_operand.vmem [shape: f32[1,128], index: 5, kind: input, shape index: {}]
  %s6 = inlined_call_operand.hbm [shape: f32[8,128], index: 6, kind: output, shape index: {}]
  %s7 = sld [smem:[#allocation0]]
  $region50: #{tpu_custom_call.1} parent=0
    _
  %s9 = ssub.s32 1, %s7
  %s10 = scalar_select 0, %s9, %s7
  $region1: #{tpu_custom_call.1} parent=0
    #allocation2 [shape = 'u8[4096]{0}', space=vmem, size = 0x1000, scoped, tag = 'input window, operand 0, single buffered']
    #allocation3 [shape = 's32[1]{0}', space=sflag, size = 0x4, scoped, tag = 'scoped memory for tpu_custom_call.1']
    #allocation4 [shape = 's32[1]{0}', space=sflag, size = 0x4, scoped, tag = 'scoped memory for tpu_custom_call.1']
    #allocation5 [shape = 'u8[2048]{0}', space=vmem, size = 0x800, scoped, tag = 'input window, operand 1, single buffered']
    #allocation6 [shape = 's32[1]{0}', space=sflag, size = 0x4, scoped, tag = 'scoped memory for tpu_custom_call.1']
    #allocation7 [shape = 'u8[262144]{0}', space=vmem, size = 0x40000, scoped, tag = 'input window, operand 2, single buffered']
    #allocation8 [shape = 'u8[65536]{0}', space=vmem, size = 0x10000, scoped, tag = 'input window, operand 3, single buffered']
    #allocation9 [shape = 's32[1]{0}', space=sflag, size = 0x4, scoped, tag = 'scoped memory for tpu_custom_call.1']
    #allocation10 [shape = 'u8[4096]{0}', space=vmem, size = 0x1000, scoped, tag = 'output window, operand 0, single buffered']
    %11 = vsyncpa [#allocation3], 0
    %12 = vsyncpa [#allocation6], 0
    %13 = vsyncpa [#allocation9], 0
    %14 = vsyncpa [#allocation4], 0
    // Predicated region
    $region2: #{tpu_custom_call.1} parent=1 // pred_check
      _
    $region3: #{tpu_custom_call.1} parent=1 // pred_check_branch
      %16 = sbr.rel (0) target = $region5
    $region4: #{tpu_custom_call.1} parent=1 // pred_region
      %s18 = ssub.s32 128, 128
      %19 = vsyncadd [#allocation3], %s18
      %s21 = sshll.u32 [#allocation2], 4
      %s22 = int_to_ptr.vmem [resolvable:$true] %s21
      %24 = dma.hbm_to_vmem [thread:$0]  %s0, 128, %s22, [#allocation3]
    $region5: #{tpu_custom_call.1} parent=1 // pred_fallthru
      _
    // Predicated region
    $region6: #{tpu_custom_call.1} parent=1 // pred_check
      _
    $region7: #{tpu_custom_call.1} parent=1 // pred_check_branch
      %26 = sbr.rel (0) target = $region9
    $region8: #{tpu_custom_call.1} parent=1 // pred_region
      %s28 = ssub.s32 64, 64
      %29 = vsyncadd [#allocation6], %s28
      %s31 = sshll.u32 [#allocation5], 4
      %s32 = int_to_ptr.vmem [resolvable:$true] %s31
      %34 = dma.hbm_to_vmem [thread:$0]  %s1, 64, %s32, [#allocation6]
    $region9: #{tpu_custom_call.1} parent=1 // pred_fallthru
      _
    // Predicated region
    $region10: #{tpu_custom_call.1} parent=1 // pred_check
      _
    $region11: #{tpu_custom_call.1} parent=1 // pred_check_branch
      %36 = sbr.rel (0) target = $region13
    $region12: #{tpu_custom_call.1} parent=1 // pred_region
      %s38 = ssub.s32 8192, 8192
      %39 = vsyncadd [#allocation6], %s38
      %s40 = sshll.u32 [#allocation7], 4
      %s41 = int_to_ptr.vmem [resolvable:$true] %s40
      %46 = dma.hbm_to_vmem [thread:$0]  %s2, 8192, %s41, [#allocation6], 512, 512, 32
    $region13: #{tpu_custom_call.1} parent=1 // pred_fallthru
      _
    // Predicated region
    $region14: #{tpu_custom_call.1} parent=1 // pred_check
      _
    $region15: #{tpu_custom_call.1} parent=1 // pred_check_branch
      %48 = sbr.rel (0) target = $region17
    $region16: #{tpu_custom_call.1} parent=1 // pred_region
      %s50 = ssub.s32 2048, 2048
      %51 = vsyncadd [#allocation9], %s50
      %s52 = sshll.u32 [#allocation8], 4
      %s53 = int_to_ptr.vmem [resolvable:$true] %s52
      %58 = dma.hbm_to_vmem [thread:$0]  %s3, 2048, %s53, [#allocation9], 128, 128, 8
    $region17: #{tpu_custom_call.1} parent=1 // pred_fallthru
      _
    // Predicated region
    $region18: #{tpu_custom_call.1} parent=1 // pred_check
      _
    $region19: #{tpu_custom_call.1} parent=1 // pred_check_branch
      %60 = sbr.rel (0) target = $region21
    $region20: #{tpu_custom_call.1} parent=1 // pred_region
      _
    $region21: #{tpu_custom_call.1} parent=1 // pred_fallthru
      _
    // Predicated region
    $region22: #{tpu_custom_call.1} parent=1 // pred_check
      _
    $region23: #{tpu_custom_call.1} parent=1 // pred_check_branch
      %62 = sbr.rel (0) target = $region25
    $region24: #{tpu_custom_call.1} parent=1 // pred_region
      _
    $region25: #{tpu_custom_call.1} parent=1 // pred_fallthru
      _
    // Predicated region
    $region26: #{tpu_custom_call.1} parent=1 // pred_check
      _
    $region27: #{tpu_custom_call.1} parent=1 // pred_check_branch
      %64 = sbr.rel (0) target = $region29
    $region28: #{tpu_custom_call.1} parent=1 // pred_region
      %65 = dma.done [#allocation3], 128
    $region29: #{tpu_custom_call.1} parent=1 // pred_fallthru
      _
    // Predicated region
    $region30: #{tpu_custom_call.1} parent=1 // pred_check
      _
    $region31: #{tpu_custom_call.1} parent=1 // pred_check_branch
      %67 = sbr.rel (0) target = $region33
    $region32: #{tpu_custom_call.1} parent=1 // pred_region
      %68 = dma.done [#allocation6], 64
    $region33: #{tpu_custom_call.1} parent=1 // pred_fallthru
      _
    // Predicated region
    $region34: #{tpu_custom_call.1} parent=1 // pred_check
      _
    $region35: #{tpu_custom_call.1} parent=1 // pred_check_branch
      %70 = sbr.rel (0) target = $region37
    $region36: #{tpu_custom_call.1} parent=1 // pred_region
      %71 = dma.done [#allocation6], 8192
    $region37: #{tpu_custom_call.1} parent=1 // pred_fallthru
      _
    // Predicated region
    $region38: #{tpu_custom_call.1} parent=1 // pred_check
      _
    $region39: #{tpu_custom_call.1} parent=1 // pred_check_branch
      %73 = sbr.rel (0) target = $region41
    $region40: #{tpu_custom_call.1} parent=1 // pred_region
      %74 = dma.done [#allocation9], 2048
    $region41: #{tpu_custom_call.1} parent=1 // pred_fallthru
      _
    %v75 = vld [vmem:[#allocation5] sm:$0xf]
    %v76 = vld [vmem:[#allocation7] sm:$0xff]
    %v77 = vld [vmem:[#allocation7 + $0x8] sm:$0xff]
    %v78 = vld [vmem:[#allocation7 + $0x10] sm:$0xff]
    %v79 = vld [vmem:[#allocation7 + $0x18] sm:$0xff]
    %v80 = vld [vmem:[#allocation7 + $0x20] sm:$0xff]
    %v81 = vld [vmem:[#allocation7 + $0x28] sm:$0xff]
    %v82 = vld [vmem:[#allocation7 + $0x30] sm:$0xff]
    %v83 = vld [vmem:[#allocation7 + $0x38] sm:$0xff]
    %v84 = vld [vmem:[#allocation7 + $0x40] sm:$0xff]
    %v85 = vld [vmem:[#allocation7 + $0x48] sm:$0xff]
    %v86 = vld [vmem:[#allocation7 + $0x50] sm:$0xff]
    %v87 = vld [vmem:[#allocation7 + $0x58] sm:$0xff]
    %v88 = vld [vmem:[#allocation7 + $0x60] sm:$0xff]
    %v89 = vld [vmem:[#allocation7 + $0x68] sm:$0xff]
    %v90 = vld [vmem:[#allocation7 + $0x70] sm:$0xff]
    %v91 = vld [vmem:[#allocation7 + $0x78] sm:$0xff]
    %v92 = vld [vmem:[#allocation7 + $0x80] sm:$0xff]
    %v93 = vld [vmem:[#allocation7 + $0x88] sm:$0xff]
    %v94 = vld [vmem:[#allocation7 + $0x90] sm:$0xff]
    %v95 = vld [vmem:[#allocation7 + $0x98] sm:$0xff]
    %v96 = vld [vmem:[#allocation7 + $0xa0] sm:$0xff]
    %v97 = vld [vmem:[#allocation7 + $0xa8] sm:$0xff]
    %v98 = vld [vmem:[#allocation7 + $0xb0] sm:$0xff]
    %v99 = vld [vmem:[#allocation7 + $0xb8] sm:$0xff]
    %v100 = vld [vmem:[#allocation7 + $0xc0] sm:$0xff]
    %v101 = vld [vmem:[#allocation7 + $0xc8] sm:$0xff]
    %v102 = vld [vmem:[#allocation7 + $0xd0] sm:$0xff]
    %v103 = vld [vmem:[#allocation7 + $0xd8] sm:$0xff]
    %v104 = vld [vmem:[#allocation7 + $0xe0] sm:$0xff]
    %v105 = vld [vmem:[#allocation7 + $0xe8] sm:$0xff]
    %v106 = vld [vmem:[#allocation7 + $0xf0] sm:$0xff]
    %v107 = vld [vmem:[#allocation7 + $0xf8] sm:$0xff]
    %v108 = vld [vmem:[#allocation7 + $0x100] sm:$0xff]
    %v109 = vld [vmem:[#allocation7 + $0x108] sm:$0xff]
    %v110 = vld [vmem:[#allocation7 + $0x110] sm:$0xff]
    %v111 = vld [vmem:[#allocation7 + $0x118] sm:$0xff]
    %v112 = vld [vmem:[#allocation7 + $0x120] sm:$0xff]
    %v113 = vld [vmem:[#allocation7 + $0x128] sm:$0xff]
    %v114 = vld [vmem:[#allocation7 + $0x130] sm:$0xff]
    %v115 = vld [vmem:[#allocation7 + $0x138] sm:$0xff]
    %v116 = vld [vmem:[#allocation7 + $0x140] sm:$0xff]
    %v117 = vld [vmem:[#allocation7 + $0x148] sm:$0xff]
    %v118 = vld [vmem:[#allocation7 + $0x150] sm:$0xff]
    %v119 = vld [vmem:[#allocation7 + $0x158] sm:$0xff]
    %v120 = vld [vmem:[#allocation7 + $0x160] sm:$0xff]
    %v121 = vld [vmem:[#allocation7 + $0x168] sm:$0xff]
    %v122 = vld [vmem:[#allocation7 + $0x170] sm:$0xff]
    %v123 = vld [vmem:[#allocation7 + $0x178] sm:$0xff]
    %v124 = vld [vmem:[#allocation7 + $0x180] sm:$0xff]
    %v125 = vld [vmem:[#allocation7 + $0x188] sm:$0xff]
    %v126 = vld [vmem:[#allocation7 + $0x190] sm:$0xff]
    %v127 = vld [vmem:[#allocation7 + $0x198] sm:$0xff]
    %v128 = vld [vmem:[#allocation7 + $0x1a0] sm:$0xff]
    %v129 = vld [vmem:[#allocation7 + $0x1a8] sm:$0xff]
    %v130 = vld [vmem:[#allocation7 + $0x1b0] sm:$0xff]
    %v131 = vld [vmem:[#allocation7 + $0x1b8] sm:$0xff]
    %v132 = vld [vmem:[#allocation7 + $0x1c0] sm:$0xff]
    %v133 = vld [vmem:[#allocation7 + $0x1c8] sm:$0xff]
    %v134 = vld [vmem:[#allocation7 + $0x1d0] sm:$0xff]
    %v135 = vld [vmem:[#allocation7 + $0x1d8] sm:$0xff]
    %v136 = vld [vmem:[#allocation7 + $0x1e0] sm:$0xff]
    %v137 = vld [vmem:[#allocation7 + $0x1e8] sm:$0xff]
    %v138 = vld [vmem:[#allocation7 + $0x1f0] sm:$0xff]
    %v139 = vld [vmem:[#allocation7 + $0x1f8] sm:$0xff]
    %v140 = vld [vmem:[%s4] sm:$0xf]
    %v142 = vlaneseq
    %v143 = vshrl.u32 %v142, 7
    %v144 = vsub.s32 0, %v143
    %v145 = vrot.slane %v140, %v144
    %v146 = vlaneseq
    %v147 = vshrl.u32 %v146, 7
    %v148 = vsub.s32 1, %v147
    %v149 = vrot.slane %v140, %v148
    %v150 = vlaneseq
    %v151 = vshrl.u32 %v150, 7
    %v152 = vsub.s32 2, %v151
    %v153 = vrot.slane %v140, %v152
    %v154 = vlaneseq
    %v155 = vshrl.u32 %v154, 7
    %v156 = vsub.s32 3, %v155
    %v157 = vrot.slane %v140, %v156
    %v162 = vld [vmem:[#allocation2] sm:$0xff]
    %164 = vset.pattern.permute.xlu0 0
    %165 = vperm.xlu0 %164, %v162
    %v166 = vpop.permute.xlu0 %165
    %v169 = vlaneseq
    %v170 = vshrl.u32 %v169, 7
    %v171 = vsub.s32 0, %v170
    %v172 = vrot.slane %v75, %v171
    %v173 = vlaneseq
    %v174 = vshrl.u32 %v173, 7
    %v175 = vsub.s32 1, %v174
    %v176 = vrot.slane %v75, %v175
    %v177 = vlaneseq
    %v178 = vshrl.u32 %v177, 7
    %v179 = vsub.s32 2, %v178
    %v180 = vrot.slane %v75, %v179
    %v181 = vlaneseq
    %v182 = vshrl.u32 %v181, 7
    %v183 = vsub.s32 3, %v182
    %v184 = vrot.slane %v75, %v183
    %v189 = vmul.f32 %v166, %v172
    %v190 = vmul.f32 %v166, %v176
    %v191 = vmul.f32 %v166, %v180
    %v192 = vmul.f32 %v166, %v184
    %v193 = vadd.f32 %v189, %v145
    %v194 = vadd.f32 %v190, %v149
    %v195 = vadd.f32 %v191, %v153
    %v196 = vadd.f32 %v192, %v157
    %197 = vset.pattern.permute.xlu0 1
    %198 = vperm.xlu0 %197, %v162
    %v199 = vpop.permute.xlu0 %198
    %v201 = vmul.f32 %v199, %v172
    %v202 = vmul.f32 %v199, %v176
    %v203 = vmul.f32 %v199, %v180
    %v204 = vmul.f32 %v199, %v184
    %v205 = vadd.f32 %v201, %v145
    %v206 = vadd.f32 %v202, %v149
    %v207 = vadd.f32 %v203, %v153
    %v208 = vadd.f32 %v204, %v157
    %209 = vset.pattern.permute.xlu0 2
    %210 = vperm.xlu0 %209, %v162
    %v211 = vpop.permute.xlu0 %210
    %v213 = vmul.f32 %v211, %v172
    %v214 = vmul.f32 %v211, %v176
    %v215 = vmul.f32 %v211, %v180
    %v216 = vmul.f32 %v211, %v184
    %v217 = vadd.f32 %v213, %v145
    %v218 = vadd.f32 %v214, %v149
    %v219 = vadd.f32 %v215, %v153
    %v220 = vadd.f32 %v216, %v157
    %221 = vset.pattern.permute.xlu0 3
    %222 = vperm.xlu0 %221, %v162
    %v223 = vpop.permute.xlu0 %222
    %v225 = vmul.f32 %v223, %v172
    %v226 = vmul.f32 %v223, %v176
    %v227 = vmul.f32 %v223, %v180
    %v228 = vmul.f32 %v223, %v184
    %v229 = vadd.f32 %v225, %v145
    %v230 = vadd.f32 %v226, %v149
    %v231 = vadd.f32 %v227, %v153
    %v232 = vadd.f32 %v228, %v157
    %233 = vset.pattern.permute.xlu0 4
    %234 = vperm.xlu0 %233, %v162
    %v235 = vpop.permute.xlu0 %234
    %v237 = vmul.f32 %v235, %v172
    %v238 = vmul.f32 %v235, %v176
    %v239 = vmul.f32 %v235, %v180
    %v240 = vmul.f32 %v235, %v184
    %v241 = vadd.f32 %v237, %v145
    %v242 = vadd.f32 %v238, %v149
    %v243 = vadd.f32 %v239, %v153
    %v244 = vadd.f32 %v240, %v157
    %245 = vset.pattern.permute.xlu0 5
    %246 = vperm.xlu0 %245, %v162
    %v247 = vpop.permute.xlu0 %246
    %v249 = vmul.f32 %v247, %v172
    %v250 = vmul.f32 %v247, %v176
    %v251 = vmul.f32 %v247, %v180
    %v252 = vmul.f32 %v247, %v184
    %v253 = vadd.f32 %v249, %v145
    %v254 = vadd.f32 %v250, %v149
    %v255 = vadd.f32 %v251, %v153
    %v256 = vadd.f32 %v252, %v157
    %257 = vset.pattern.permute.xlu0 6
    %258 = vperm.xlu0 %257, %v162
    %v259 = vpop.permute.xlu0 %258
    %v261 = vmul.f32 %v259, %v172
    %v262 = vmul.f32 %v259, %v176
    %v263 = vmul.f32 %v259, %v180
    %v264 = vmul.f32 %v259, %v184
    %v265 = vadd.f32 %v261, %v145
    %v266 = vadd.f32 %v262, %v149
    %v267 = vadd.f32 %v263, %v153
    %v268 = vadd.f32 %v264, %v157
    %269 = vmatprep.subr.mxu0 %v77
    %270 = vmatpush1.msra.mxu0 %v76
    %271 = vmatprep.subr.mxu0 %v81
    %272 = vmatpush1.msra.mxu0 %v80
    %273 = vmatprep.subr.mxu0 %v85
    %274 = vmatpush1.msra.mxu0 %v84
    %275 = vmatprep.subr.mxu0 %v89
    %276 = vmatpush1.msra.mxu0 %v88
    %277 = vmatprep.subr.mxu0 %v93
    %278 = vmatpush1.msra.mxu0 %v92
    %279 = vmatprep.subr.mxu0 %v97
    %280 = vmatpush1.msra.mxu0 %v96
    %281 = vmatprep.subr.mxu0 %v101
    %282 = vmatpush1.msra.mxu0 %v100
    %283 = vmatprep.subr.mxu0 %v105
    %284 = vmatpush1.msra.mxu0 %v104
    %285 = vmatprep.subr.mxu0 %v109
    %286 = vmatpush1.msra.mxu0 %v108
    %287 = vmatprep.subr.mxu0 %v113
    %288 = vmatpush1.msra.mxu0 %v112
    %289 = vmatprep.subr.mxu0 %v117
    %290 = vmatpush1.msra.mxu0 %v116
    %291 = vmatprep.subr.mxu0 %v121
    %292 = vmatpush1.msra.mxu0 %v120
    %293 = vmatprep.subr.mxu0 %v125
    %294 = vmatpush1.msra.mxu0 %v124
    %295 = vmatprep.subr.mxu0 %v129
    %296 = vmatpush1.msra.mxu0 %v128
    %297 = vmatprep.subr.mxu0 %v133
    %298 = vmatpush1.msra.mxu0 %v132
    %299 = vmatprep.subr.mxu0 %v137
    %300 = vmatpush1.msra.mxu0 %v136
    %301 = vmatprep.subr.mxu0 0.0
    %302 = vmatpush1.msra.mxu0 0.0
    %303 = vmatprep.subr.mxu0 0.0
    %304 = vmatpush1.msra.mxu0 0.0
    %305 = vmatprep.subr.mxu0 0.0
    %306 = vmatpush1.msra.mxu0 0.0
    %307 = vmatprep.subr.mxu0 0.0
    %308 = vmatpush1.msra.mxu0 0.0
    %309 = vmatprep.subr.mxu0 0.0
    %310 = vmatpush1.msra.mxu0 0.0
    %311 = vmatprep.subr.mxu0 0.0
    %312 = vmatpush1.msra.mxu0 0.0
    %313 = vmatprep.subr.mxu0 0.0
    %314 = vmatpush1.msra.mxu0 0.0
    %315 = vmatprep.subr.mxu0 0.0
    %316 = vmatpush1.msra.mxu0 0.0
    %317 = vmatprep.subr.mxu0 0.0
    %318 = vmatpush1.msra.mxu0 0.0
    %319 = vmatprep.subr.mxu0 0.0
    %320 = vmatpush1.msra.mxu0 0.0
    %321 = vmatprep.subr.mxu0 0.0
    %322 = vmatpush1.msra.mxu0 0.0
    %323 = vmatprep.subr.mxu0 0.0
    %324 = vmatpush1.msra.mxu0 0.0
    %325 = vmatprep.subr.mxu0 0.0
    %326 = vmatpush1.msra.mxu0 0.0
    %327 = vmatprep.subr.mxu0 0.0
    %328 = vmatpush1.msra.mxu0 0.0
    %329 = vmatprep.subr.mxu0 0.0
    %330 = vmatpush1.msra.mxu0 0.0
    %331 = vmatprep.subr.mxu0 0.0
    %332 = vmatpush1.msra.mxu0 0.0
    %333 = vmatprep.mubr.f32.mxu0 0.0
    %334 = vmatmul.mubr.f32.gmra.mrb[0].mxu0 0.0
    %v335 = vpop.f32.mrb[0].mxu0
    %v336 = vadd.f32 0.0, %v335
    %v337 = vpop.f32.mrb[0].mxu0
    %v338 = vadd.f32 0.0, %v337
    %339 = vdwg.mxu0
    %340 = vmatprep.subr.mxu0 %v79
    %341 = vmatpush1.msra.mxu0 %v78
    %342 = vmatprep.subr.mxu0 %v83
    %343 = vmatpush1.msra.mxu0 %v82
    %344 = vmatprep.subr.mxu0 %v87
    %345 = vmatpush1.msra.mxu0 %v86
    %346 = vmatprep.subr.mxu0 %v91
    %347 = vmatpush1.msra.mxu0 %v90
    %348 = vmatprep.subr.mxu0 %v95
    %349 = vmatpush1.msra.mxu0 %v94
    %350 = vmatprep.subr.mxu0 %v99
    %351 = vmatpush1.msra.mxu0 %v98
    %352 = vmatprep.subr.mxu0 %v103
    %353 = vmatpush1.msra.mxu0 %v102
    %354 = vmatprep.subr.mxu0 %v107
    %355 = vmatpush1.msra.mxu0 %v106
    %356 = vmatprep.subr.mxu0 %v111
    %357 = vmatpush1.msra.mxu0 %v110
    %358 = vmatprep.subr.mxu0 %v115
    %359 = vmatpush1.msra.mxu0 %v114
    %360 = vmatprep.subr.mxu0 %v119
    %361 = vmatpush1.msra.mxu0 %v118
    %362 = vmatprep.subr.mxu0 %v123
    %363 = vmatpush1.msra.mxu0 %v122
    %364 = vmatprep.subr.mxu0 %v127
    %365 = vmatpush1.msra.mxu0 %v126
    %366 = vmatprep.subr.mxu0 %v131
    %367 = vmatpush1.msra.mxu0 %v130
    %368 = vmatprep.subr.mxu0 %v135
    %369 = vmatpush1.msra.mxu0 %v134
    %370 = vmatprep.subr.mxu0 %v139
    %371 = vmatpush1.msra.mxu0 %v138
    %372 = vmatprep.subr.mxu0 0.0
    %373 = vmatpush1.msra.mxu0 0.0
    %374 = vmatprep.subr.mxu0 0.0
    %375 = vmatpush1.msra.mxu0 0.0
    %376 = vmatprep.subr.mxu0 0.0
    %377 = vmatpush1.msra.mxu0 0.0
    %378 = vmatprep.subr.mxu0 0.0
    %379 = vmatpush1.msra.mxu0 0.0
    %380 = vmatprep.subr.mxu0 0.0
    %381 = vmatpush1.msra.mxu0 0.0
    %382 = vmatprep.subr.mxu0 0.0
    %383 = vmatpush1.msra.mxu0 0.0
    %384 = vmatprep.subr.mxu0 0.0
    %385 = vmatpush1.msra.mxu0 0.0
    %386 = vmatprep.subr.mxu0 0.0
    %387 = vmatpush1.msra.mxu0 0.0
    %388 = vmatprep.subr.mxu0 0.0
    %389 = vmatpush1.msra.mxu0 0.0
    %390 = vmatprep.subr.mxu0 0.0
    %391 = vmatpush1.msra.mxu0 0.0
    %392 = vmatprep.subr.mxu0 0.0
    %393 = vmatpush1.msra.mxu0 0.0
    %394 = vmatprep.subr.mxu0 0.0
    %395 = vmatpush1.msra.mxu0 0.0
    %396 = vmatprep.subr.mxu0 0.0
    %397 = vmatpush1.msra.mxu0 0.0
    %398 = vmatprep.subr.mxu0 0.0
    %399 = vmatpush1.msra.mxu0 0.0
    %400 = vmatprep.subr.mxu0 0.0
    %401 = vmatpush1.msra.mxu0 0.0
    %402 = vmatprep.subr.mxu0 0.0
    %403 = vmatpush1.msra.mxu0 0.0
    %404 = vmatprep.mubr.f32.mxu0 0.0
    %405 = vmatmul.mubr.f32.gmra.mrb[0].mxu0 0.0
    %v406 = vpop.f32.mrb[0].mxu0
    %v407 = vadd.f32 0.0, %v406
    %v408 = vpop.f32.mrb[0].mxu0
    %v409 = vadd.f32 0.0, %v408
    %410 = vdwg.mxu0
    %v411 = vadd.f32 %v193, %v336
    %v412 = vadd.f32 %v194, %v338
    %v413 = vadd.f32 %v195, %v407
    %v414 = vadd.f32 %v196, %v409
    %v415 = vtanh.pop %v411
    %v416 = vxor.u32 %v412, 2147483648
    %v417 = vmul.f32 %v416, 1.442695
    %v418 = vpow.pop %v417
    %v419 = vadd.f32 %v418, 1.0
    %v420 = vrcp.pop %v419
    %v421 = vmul.f32 1.0, %v420
    %v422 = vxor.u32 %v413, 2147483648
    %v423 = vmul.f32 %v422, 1.442695
    %v424 = vpow.pop %v423
    %v425 = vadd.f32 %v424, 1.0
    %v426 = vrcp.pop %v425
    %v427 = vmul.f32 1.0, %v426
    %v428 = vxor.u32 %v414, 2147483648
    %v429 = vmul.f32 %v428, 1.442695
    %v430 = vpow.pop %v429
    %v431 = vadd.f32 %v430, 1.0
    %v432 = vrcp.pop %v431
    %v433 = vmul.f32 1.0, %v432
    %v434 = vmul.f32 %v415, %v421
    %v435 = vmul.f32 %v427, 0.0
    %v436 = vadd.f32 %v434, %v435
    %v437 = vtanh.pop %v436
    %v438 = vmul.f32 %v437, %v433
    %439 = vmatprep.subr.mxu0 %v77
    %440 = vmatpush1.msra.mxu0 %v76
    %441 = vmatprep.subr.mxu0 %v81
    %442 = vmatpush1.msra.mxu0 %v80
    %443 = vmatprep.subr.mxu0 %v85
    %444 = vmatpush1.msra.mxu0 %v84
    %445 = vmatprep.subr.mxu0 %v89
    %446 = vmatpush1.msra.mxu0 %v88
    %447 = vmatprep.subr.mxu0 %v93
    %448 = vmatpush1.msra.mxu0 %v92
    %449 = vmatprep.subr.mxu0 %v97
    %450 = vmatpush1.msra.mxu0 %v96
    %451 = vmatprep.subr.mxu0 %v101
    %452 = vmatpush1.msra.mxu0 %v100
    %453 = vmatprep.subr.mxu0 %v105
    %454 = vmatpush1.msra.mxu0 %v104
    %455 = vmatprep.subr.mxu0 %v109
    %456 = vmatpush1.msra.mxu0 %v108
    %457 = vmatprep.subr.mxu0 %v113
    %458 = vmatpush1.msra.mxu0 %v112
    %459 = vmatprep.subr.mxu0 %v117
    %460 = vmatpush1.msra.mxu0 %v116
    %461 = vmatprep.subr.mxu0 %v121
    %462 = vmatpush1.msra.mxu0 %v120
    %463 = vmatprep.subr.mxu0 %v125
    %464 = vmatpush1.msra.mxu0 %v124
    %465 = vmatprep.subr.mxu0 %v129
    %466 = vmatpush1.msra.mxu0 %v128
    %467 = vmatprep.subr.mxu0 %v133
    %468 = vmatpush1.msra.mxu0 %v132
    %469 = vmatprep.subr.mxu0 %v137
    %470 = vmatpush1.msra.mxu0 %v136
    %471 = vmatprep.subr.mxu0 0.0
    %472 = vmatpush1.msra.mxu0 0.0
    %473 = vmatprep.subr.mxu0 0.0
    %474 = vmatpush1.msra.mxu0 0.0
    %475 = vmatprep.subr.mxu0 0.0
    %476 = vmatpush1.msra.mxu0 0.0
    %477 = vmatprep.subr.mxu0 0.0
    %478 = vmatpush1.msra.mxu0 0.0
    %479 = vmatprep.subr.mxu0 0.0
    %480 = vmatpush1.msra.mxu0 0.0
    %481 = vmatprep.subr.mxu0 0.0
    %482 = vmatpush1.msra.mxu0 0.0
    %483 = vmatprep.subr.mxu0 0.0
    %484 = vmatpush1.msra.mxu0 0.0
    %485 = vmatprep.subr.mxu0 0.0
    %486 = vmatpush1.msra.mxu0 0.0
    %487 = vmatprep.subr.mxu0 0.0
    %488 = vmatpush1.msra.mxu0 0.0
    %489 = vmatprep.subr.mxu0 0.0
    %490 = vmatpush1.msra.mxu0 0.0
    %491 = vmatprep.subr.mxu0 0.0
    %492 = vmatpush1.msra.mxu0 0.0
    %493 = vmatprep.subr.mxu0 0.0
    %494 = vmatpush1.msra.mxu0 0.0
    %495 = vmatprep.subr.mxu0 0.0
    %496 = vmatpush1.msra.mxu0 0.0
    %497 = vmatprep.subr.mxu0 0.0
    %498 = vmatpush1.msra.mxu0 0.0
    %499 = vmatprep.subr.mxu0 0.0
    %500 = vmatpush1.msra.mxu0 0.0
    %501 = vmatprep.subr.mxu0 0.0
    %502 = vmatpush1.msra.mxu0 0.0
    %503 = vmatprep.mubr.f32.mxu0 0.0
    %504 = vmatmul.mubr.f32.gmra.mrb[0].mxu0 %v438
    %v505 = vpop.f32.mrb[0].mxu0
    %v506 = vadd.f32 0.0, %v505
    %v507 = vpop.f32.mrb[0].mxu0
    %v508 = vadd.f32 0.0, %v507
    %509 = vdwg.mxu0
    %510 = vmatprep.subr.mxu0 %v79
    %511 = vmatpush1.msra.mxu0 %v78
    %512 = vmatprep.subr.mxu0 %v83
    %513 = vmatpush1.msra.mxu0 %v82
    %514 = vmatprep.subr.mxu0 %v87
    %515 = vmatpush1.msra.mxu0 %v86
    %516 = vmatprep.subr.mxu0 %v91
    %517 = vmatpush1.msra.mxu0 %v90
    %518 = vmatprep.subr.mxu0 %v95
    %519 = vmatpush1.msra.mxu0 %v94
    %520 = vmatprep.subr.mxu0 %v99
    %521 = vmatpush1.msra.mxu0 %v98
    %522 = vmatprep.subr.mxu0 %v103
    %523 = vmatpush1.msra.mxu0 %v102
    %524 = vmatprep.subr.mxu0 %v107
    %525 = vmatpush1.msra.mxu0 %v106
    %526 = vmatprep.subr.mxu0 %v111
    %527 = vmatpush1.msra.mxu0 %v110
    %528 = vmatprep.subr.mxu0 %v115
    %529 = vmatpush1.msra.mxu0 %v114
    %530 = vmatprep.subr.mxu0 %v119
    %531 = vmatpush1.msra.mxu0 %v118
    %532 = vmatprep.subr.mxu0 %v123
    %533 = vmatpush1.msra.mxu0 %v122
    %534 = vmatprep.subr.mxu0 %v127
    %535 = vmatpush1.msra.mxu0 %v126
    %536 = vmatprep.subr.mxu0 %v131
    %537 = vmatpush1.msra.mxu0 %v130
    %538 = vmatprep.subr.mxu0 %v135
    %539 = vmatpush1.msra.mxu0 %v134
    %540 = vmatprep.subr.mxu0 %v139
    %541 = vmatpush1.msra.mxu0 %v138
    %542 = vmatprep.subr.mxu0 0.0
    %543 = vmatpush1.msra.mxu0 0.0
    %544 = vmatprep.subr.mxu0 0.0
    %545 = vmatpush1.msra.mxu0 0.0
    %546 = vmatprep.subr.mxu0 0.0
    %547 = vmatpush1.msra.mxu0 0.0
    %548 = vmatprep.subr.mxu0 0.0
    %549 = vmatpush1.msra.mxu0 0.0
    %550 = vmatprep.subr.mxu0 0.0
    %551 = vmatpush1.msra.mxu0 0.0
    %552 = vmatprep.subr.mxu0 0.0
    %553 = vmatpush1.msra.mxu0 0.0
    %554 = vmatprep.subr.mxu0 0.0
    %555 = vmatpush1.msra.mxu0 0.0
    %556 = vmatprep.subr.mxu0 0.0
    %557 = vmatpush1.msra.mxu0 0.0
    %558 = vmatprep.subr.mxu0 0.0
    %559 = vmatpush1.msra.mxu0 0.0
    %560 = vmatprep.subr.mxu0 0.0
    %561 = vmatpush1.msra.mxu0 0.0
    %562 = vmatprep.subr.mxu0 0.0
    %563 = vmatpush1.msra.mxu0 0.0
    %564 = vmatprep.subr.mxu0 0.0
    %565 = vmatpush1.msra.mxu0 0.0
    %566 = vmatprep.subr.mxu0 0.0
    %567 = vmatpush1.msra.mxu0 0.0
    %568 = vmatprep.subr.mxu0 0.0
    %569 = vmatpush1.msra.mxu0 0.0
    %570 = vmatprep.subr.mxu0 0.0
    %571 = vmatpush1.msra.mxu0 0.0
    %572 = vmatprep.subr.mxu0 0.0
    %573 = vmatpush1.msra.mxu0 0.0
    %574 = vmatprep.mubr.f32.mxu0 0.0
    %575 = vmatmul.mubr.f32.gmra.mrb[0].mxu0 %v438
    %v576 = vpop.f32.mrb[0].mxu0
    %v577 = vadd.f32 0.0, %v576
    %v578 = vpop.f32.mrb[0].mxu0
    %v579 = vadd.f32 0.0, %v578
    %580 = vdwg.mxu0
    %v581 = vadd.f32 %v205, %v506
    %v582 = vadd.f32 %v206, %v508
    %v583 = vadd.f32 %v207, %v577
    %v584 = vadd.f32 %v208, %v579
    %v585 = vtanh.pop %v581
    %v586 = vxor.u32 %v582, 2147483648
    %v587 = vmul.f32 %v586, 1.442695
    %v588 = vpow.pop %v587
    %v589 = vadd.f32 %v588, 1.0
    %v590 = vrcp.pop %v589
    %v591 = vmul.f32 1.0, %v590
    %v592 = vxor.u32 %v583, 2147483648
    %v593 = vmul.f32 %v592, 1.442695
    %v594 = vpow.pop %v593
    %v595 = vadd.f32 %v594, 1.0
    %v596 = vrcp.pop %v595
    %v597 = vmul.f32 1.0, %v596
    %v598 = vxor.u32 %v584, 2147483648
    %v599 = vmul.f32 %v598, 1.442695
    %v600 = vpow.pop %v599
    %v601 = vadd.f32 %v600, 1.0
    %v602 = vrcp.pop %v601
    %v603 = vmul.f32 1.0, %v602
    %v604 = vmul.f32 %v585, %v591
    %v605 = vmul.f32 %v436, %v597
    %v606 = vadd.f32 %v604, %v605
    %v607 = vtanh.pop %v606
    %v608 = vmul.f32 %v607, %v603
    %609 = vmatprep.subr.mxu0 %v77
    %610 = vmatpush1.msra.mxu0 %v76
    %611 = vmatprep.subr.mxu0 %v81
    %612 = vmatpush1.msra.mxu0 %v80
    %613 = vmatprep.subr.mxu0 %v85
    %614 = vmatpush1.msra.mxu0 %v84
    %615 = vmatprep.subr.mxu0 %v89
    %616 = vmatpush1.msra.mxu0 %v88
    %617 = vmatprep.subr.mxu0 %v93
    %618 = vmatpush1.msra.mxu0 %v92
    %619 = vmatprep.subr.mxu0 %v97
    %620 = vmatpush1.msra.mxu0 %v96
    %621 = vmatprep.subr.mxu0 %v101
    %622 = vmatpush1.msra.mxu0 %v100
    %623 = vmatprep.subr.mxu0 %v105
    %624 = vmatpush1.msra.mxu0 %v104
    %625 = vmatprep.subr.mxu0 %v109
    %626 = vmatpush1.msra.mxu0 %v108
    %627 = vmatprep.subr.mxu0 %v113
    %628 = vmatpush1.msra.mxu0 %v112
    %629 = vmatprep.subr.mxu0 %v117
    %630 = vmatpush1.msra.mxu0 %v116
    %631 = vmatprep.subr.mxu0 %v121
    %632 = vmatpush1.msra.mxu0 %v120
    %633 = vmatprep.subr.mxu0 %v125
    %634 = vmatpush1.msra.mxu0 %v124
    %635 = vmatprep.subr.mxu0 %v129
    %636 = vmatpush1.msra.mxu0 %v128
    %637 = vmatprep.subr.mxu0 %v133
    %638 = vmatpush1.msra.mxu0 %v132
    %639 = vmatprep.subr.mxu0 %v137
    %640 = vmatpush1.msra.mxu0 %v136
    %641 = vmatprep.subr.mxu0 0.0
    %642 = vmatpush1.msra.mxu0 0.0
    %643 = vmatprep.subr.mxu0 0.0
    %644 = vmatpush1.msra.mxu0 0.0
    %645 = vmatprep.subr.mxu0 0.0
    %646 = vmatpush1.msra.mxu0 0.0
    %647 = vmatprep.subr.mxu0 0.0
    %648 = vmatpush1.msra.mxu0 0.0
    %649 = vmatprep.subr.mxu0 0.0
    %650 = vmatpush1.msra.mxu0 0.0
    %651 = vmatprep.subr.mxu0 0.0
    %652 = vmatpush1.msra.mxu0 0.0
    %653 = vmatprep.subr.mxu0 0.0
    %654 = vmatpush1.msra.mxu0 0.0
    %655 = vmatprep.subr.mxu0 0.0
    %656 = vmatpush1.msra.mxu0 0.0
    %657 = vmatprep.subr.mxu0 0.0
    %658 = vmatpush1.msra.mxu0 0.0
    %659 = vmatprep.subr.mxu0 0.0
    %660 = vmatpush1.msra.mxu0 0.0
    %661 = vmatprep.subr.mxu0 0.0
    %662 = vmatpush1.msra.mxu0 0.0
    %663 = vmatprep.subr.mxu0 0.0
    %664 = vmatpush1.msra.mxu0 0.0
    %665 = vmatprep.subr.mxu0 0.0
    %666 = vmatpush1.msra.mxu0 0.0
    %667 = vmatprep.subr.mxu0 0.0
    %668 = vmatpush1.msra.mxu0 0.0
    %669 = vmatprep.subr.mxu0 0.0
    %670 = vmatpush1.msra.mxu0 0.0
    %671 = vmatprep.subr.mxu0 0.0
    %672 = vmatpush1.msra.mxu0 0.0
    %673 = vmatprep.mubr.f32.mxu0 0.0
    %674 = vmatmul.mubr.f32.gmra.mrb[0].mxu0 %v608
    %v675 = vpop.f32.mrb[0].mxu0
    %v676 = vadd.f32 0.0, %v675
    %v677 = vpop.f32.mrb[0].mxu0
    %v678 = vadd.f32 0.0, %v677
    %679 = vdwg.mxu0
    %680 = vmatprep.subr.mxu0 %v79
    %681 = vmatpush1.msra.mxu0 %v78
    %682 = vmatprep.subr.mxu0 %v83
    %683 = vmatpush1.msra.mxu0 %v82
    %684 = vmatprep.subr.mxu0 %v87
    %685 = vmatpush1.msra.mxu0 %v86
    %686 = vmatprep.subr.mxu0 %v91
    %687 = vmatpush1.msra.mxu0 %v90
    %688 = vmatprep.subr.mxu0 %v95
    %689 = vmatpush1.msra.mxu0 %v94
    %690 = vmatprep.subr.mxu0 %v99
    %691 = vmatpush1.msra.mxu0 %v98
    %692 = vmatprep.subr.mxu0 %v103
    %693 = vmatpush1.msra.mxu0 %v102
    %694 = vmatprep.subr.mxu0 %v107
    %695 = vmatpush1.msra.mxu0 %v106
    %696 = vmatprep.subr.mxu0 %v111
    %697 = vmatpush1.msra.mxu0 %v110
    %698 = vmatprep.subr.mxu0 %v115
    %699 = vmatpush1.msra.mxu0 %v114
    %700 = vmatprep.subr.mxu0 %v119
    %701 = vmatpush1.msra.mxu0 %v118
    %702 = vmatprep.subr.mxu0 %v123
    %703 = vmatpush1.msra.mxu0 %v122
    %704 = vmatprep.subr.mxu0 %v127
    %705 = vmatpush1.msra.mxu0 %v126
    %706 = vmatprep.subr.mxu0 %v131
    %707 = vmatpush1.msra.mxu0 %v130
    %708 = vmatprep.subr.mxu0 %v135
    %709 = vmatpush1.msra.mxu0 %v134
    %710 = vmatprep.subr.mxu0 %v139
    %711 = vmatpush1.msra.mxu0 %v138
    %712 = vmatprep.subr.mxu0 0.0
    %713 = vmatpush1.msra.mxu0 0.0
    %714 = vmatprep.subr.mxu0 0.0
    %715 = vmatpush1.msra.mxu0 0.0
    %716 = vmatprep.subr.mxu0 0.0
    %717 = vmatpush1.msra.mxu0 0.0
    %718 = vmatprep.subr.mxu0 0.0
    %719 = vmatpush1.msra.mxu0 0.0
    %720 = vmatprep.subr.mxu0 0.0
    %721 = vmatpush1.msra.mxu0 0.0
    %722 = vmatprep.subr.mxu0 0.0
    %723 = vmatpush1.msra.mxu0 0.0
    %724 = vmatprep.subr.mxu0 0.0
    %725 = vmatpush1.msra.mxu0 0.0
    %726 = vmatprep.subr.mxu0 0.0
    %727 = vmatpush1.msra.mxu0 0.0
    %728 = vmatprep.subr.mxu0 0.0
    %729 = vmatpush1.msra.mxu0 0.0
    %730 = vmatprep.subr.mxu0 0.0
    %731 = vmatpush1.msra.mxu0 0.0
    %732 = vmatprep.subr.mxu0 0.0
    %733 = vmatpush1.msra.mxu0 0.0
    %734 = vmatprep.subr.mxu0 0.0
    %735 = vmatpush1.msra.mxu0 0.0
    %736 = vmatprep.subr.mxu0 0.0
    %737 = vmatpush1.msra.mxu0 0.0
    %738 = vmatprep.subr.mxu0 0.0
    %739 = vmatpush1.msra.mxu0 0.0
    %740 = vmatprep.subr.mxu0 0.0
    %741 = vmatpush1.msra.mxu0 0.0
    %742 = vmatprep.subr.mxu0 0.0
    %743 = vmatpush1.msra.mxu0 0.0
    %744 = vmatprep.mubr.f32.mxu0 0.0
    %745 = vmatmul.mubr.f32.gmra.mrb[0].mxu0 %v608
    %v746 = vpop.f32.mrb[0].mxu0
    %v747 = vadd.f32 0.0, %v746
    %v748 = vpop.f32.mrb[0].mxu0
    %v749 = vadd.f32 0.0, %v748
    %750 = vdwg.mxu0
    %v751 = vadd.f32 %v217, %v676
    %v752 = vadd.f32 %v218, %v678
    %v753 = vadd.f32 %v219, %v747
    %v754 = vadd.f32 %v220, %v749
    %v755 = vtanh.pop %v751
    %v756 = vxor.u32 %v752, 2147483648
    %v757 = vmul.f32 %v756, 1.442695
    %v758 = vpow.pop %v757
    %v759 = vadd.f32 %v758, 1.0
    %v760 = vrcp.pop %v759
    %v761 = vmul.f32 1.0, %v760
    %v762 = vxor.u32 %v753, 2147483648
    %v763 = vmul.f32 %v762, 1.442695
    %v764 = vpow.pop %v763
    %v765 = vadd.f32 %v764, 1.0
    %v766 = vrcp.pop %v765
    %v767 = vmul.f32 1.0, %v766
    %v768 = vxor.u32 %v754, 2147483648
    %v769 = vmul.f32 %v768, 1.442695
    %v770 = vpow.pop %v769
    %v771 = vadd.f32 %v770, 1.0
    %v772 = vrcp.pop %v771
    %v773 = vmul.f32 1.0, %v772
    %v774 = vmul.f32 %v755, %v761
    %v775 = vmul.f32 %v606, %v767
    %v776 = vadd.f32 %v774, %v775
    %v777 = vtanh.pop %v776
    %v778 = vmul.f32 %v777, %v773
    %779 = vmatprep.subr.mxu0 %v77
    %780 = vmatpush1.msra.mxu0 %v76
    %781 = vmatprep.subr.mxu0 %v81
    %782 = vmatpush1.msra.mxu0 %v80
    %783 = vmatprep.subr.mxu0 %v85
    %784 = vmatpush1.msra.mxu0 %v84
    %785 = vmatprep.subr.mxu0 %v89
    %786 = vmatpush1.msra.mxu0 %v88
    %787 = vmatprep.subr.mxu0 %v93
    %788 = vmatpush1.msra.mxu0 %v92
    %789 = vmatprep.subr.mxu0 %v97
    %790 = vmatpush1.msra.mxu0 %v96
    %791 = vmatprep.subr.mxu0 %v101
    %792 = vmatpush1.msra.mxu0 %v100
    %793 = vmatprep.subr.mxu0 %v105
    %794 = vmatpush1.msra.mxu0 %v104
    %795 = vmatprep.subr.mxu0 %v109
    %796 = vmatpush1.msra.mxu0 %v108
    %797 = vmatprep.subr.mxu0 %v113
    %798 = vmatpush1.msra.mxu0 %v112
    %799 = vmatprep.subr.mxu0 %v117
    %800 = vmatpush1.msra.mxu0 %v116
    %801 = vmatprep.subr.mxu0 %v121
    %802 = vmatpush1.msra.mxu0 %v120
    %803 = vmatprep.subr.mxu0 %v125
    %804 = vmatpush1.msra.mxu0 %v124
    %805 = vmatprep.subr.mxu0 %v129
    %806 = vmatpush1.msra.mxu0 %v128
    %807 = vmatprep.subr.mxu0 %v133
    %808 = vmatpush1.msra.mxu0 %v132
    %809 = vmatprep.subr.mxu0 %v137
    %810 = vmatpush1.msra.mxu0 %v136
    %811 = vmatprep.subr.mxu0 0.0
    %812 = vmatpush1.msra.mxu0 0.0
    %813 = vmatprep.subr.mxu0 0.0
    %814 = vmatpush1.msra.mxu0 0.0
    %815 = vmatprep.subr.mxu0 0.0
    %816 = vmatpush1.msra.mxu0 0.0
    %817 = vmatprep.subr.mxu0 0.0
    %818 = vmatpush1.msra.mxu0 0.0
    %819 = vmatprep.subr.mxu0 0.0
    %820 = vmatpush1.msra.mxu0 0.0
    %821 = vmatprep.subr.mxu0 0.0
    %822 = vmatpush1.msra.mxu0 0.0
    %823 = vmatprep.subr.mxu0 0.0
    %824 = vmatpush1.msra.mxu0 0.0
    %825 = vmatprep.subr.mxu0 0.0
    %826 = vmatpush1.msra.mxu0 0.0
    %827 = vmatprep.subr.mxu0 0.0
    %828 = vmatpush1.msra.mxu0 0.0
    %829 = vmatprep.subr.mxu0 0.0
    %830 = vmatpush1.msra.mxu0 0.0
    %831 = vmatprep.subr.mxu0 0.0
    %832 = vmatpush1.msra.mxu0 0.0
    %833 = vmatprep.subr.mxu0 0.0
    %834 = vmatpush1.msra.mxu0 0.0
    %835 = vmatprep.subr.mxu0 0.0
    %836 = vmatpush1.msra.mxu0 0.0
    %837 = vmatprep.subr.mxu0 0.0
    %838 = vmatpush1.msra.mxu0 0.0
    %839 = vmatprep.subr.mxu0 0.0
    %840 = vmatpush1.msra.mxu0 0.0
    %841 = vmatprep.subr.mxu0 0.0
    %842 = vmatpush1.msra.mxu0 0.0
    %843 = vmatprep.mubr.f32.mxu0 0.0
    %844 = vmatmul.mubr.f32.gmra.mrb[0].mxu0 %v778
    %v845 = vpop.f32.mrb[0].mxu0
    %v846 = vadd.f32 0.0, %v845
    %v847 = vpop.f32.mrb[0].mxu0
    %v848 = vadd.f32 0.0, %v847
    %849 = vdwg.mxu0
    %850 = vmatprep.subr.mxu0 %v79
    %851 = vmatpush1.msra.mxu0 %v78
    %852 = vmatprep.subr.mxu0 %v83
    %853 = vmatpush1.msra.mxu0 %v82
    %854 = vmatprep.subr.mxu0 %v87
    %855 = vmatpush1.msra.mxu0 %v86
    %856 = vmatprep.subr.mxu0 %v91
    %857 = vmatpush1.msra.mxu0 %v90
    %858 = vmatprep.subr.mxu0 %v95
    %859 = vmatpush1.msra.mxu0 %v94
    %860 = vmatprep.subr.mxu0 %v99
    %861 = vmatpush1.msra.mxu0 %v98
    %862 = vmatprep.subr.mxu0 %v103
    %863 = vmatpush1.msra.mxu0 %v102
    %864 = vmatprep.subr.mxu0 %v107
    %865 = vmatpush1.msra.mxu0 %v106
    %866 = vmatprep.subr.mxu0 %v111
    %867 = vmatpush1.msra.mxu0 %v110
    %868 = vmatprep.subr.mxu0 %v115
    %869 = vmatpush1.msra.mxu0 %v114
    %870 = vmatprep.subr.mxu0 %v119
    %871 = vmatpush1.msra.mxu0 %v118
    %872 = vmatprep.subr.mxu0 %v123
    %873 = vmatpush1.msra.mxu0 %v122
    %874 = vmatprep.subr.mxu0 %v127
    %875 = vmatpush1.msra.mxu0 %v126
    %876 = vmatprep.subr.mxu0 %v131
    %877 = vmatpush1.msra.mxu0 %v130
    %878 = vmatprep.subr.mxu0 %v135
    %879 = vmatpush1.msra.mxu0 %v134
    %880 = vmatprep.subr.mxu0 %v139
    %881 = vmatpush1.msra.mxu0 %v138
    %882 = vmatprep.subr.mxu0 0.0
    %883 = vmatpush1.msra.mxu0 0.0
    %884 = vmatprep.subr.mxu0 0.0
    %885 = vmatpush1.msra.mxu0 0.0
    %886 = vmatprep.subr.mxu0 0.0
    %887 = vmatpush1.msra.mxu0 0.0
    %888 = vmatprep.subr.mxu0 0.0
    %889 = vmatpush1.msra.mxu0 0.0
    %890 = vmatprep.subr.mxu0 0.0
    %891 = vmatpush1.msra.mxu0 0.0
    %892 = vmatprep.subr.mxu0 0.0
    %893 = vmatpush1.msra.mxu0 0.0
    %894 = vmatprep.subr.mxu0 0.0
    %895 = vmatpush1.msra.mxu0 0.0
    %896 = vmatprep.subr.mxu0 0.0
    %897 = vmatpush1.msra.mxu0 0.0
    %898 = vmatprep.subr.mxu0 0.0
    %899 = vmatpush1.msra.mxu0 0.0
    %900 = vmatprep.subr.mxu0 0.0
    %901 = vmatpush1.msra.mxu0 0.0
    %902 = vmatprep.subr.mxu0 0.0
    %903 = vmatpush1.msra.mxu0 0.0
    %904 = vmatprep.subr.mxu0 0.0
    %905 = vmatpush1.msra.mxu0 0.0
    %906 = vmatprep.subr.mxu0 0.0
    %907 = vmatpush1.msra.mxu0 0.0
    %908 = vmatprep.subr.mxu0 0.0
    %909 = vmatpush1.msra.mxu0 0.0
    %910 = vmatprep.subr.mxu0 0.0
    %911 = vmatpush1.msra.mxu0 0.0
    %912 = vmatprep.subr.mxu0 0.0
    %913 = vmatpush1.msra.mxu0 0.0
    %914 = vmatprep.mubr.f32.mxu0 0.0
    %915 = vmatmul.mubr.f32.gmra.mrb[0].mxu0 %v778
    %v916 = vpop.f32.mrb[0].mxu0
    %v917 = vadd.f32 0.0, %v916
    %v918 = vpop.f32.mrb[0].mxu0
    %v919 = vadd.f32 0.0, %v918
    %920 = vdwg.mxu0
    %v921 = vadd.f32 %v229, %v846
    %v922 = vadd.f32 %v230, %v848
    %v923 = vadd.f32 %v231, %v917
    %v924 = vadd.f32 %v232, %v919
    %v925 = vtanh.pop %v921
    %v926 = vxor.u32 %v922, 2147483648
    %v927 = vmul.f32 %v926, 1.442695
    %v928 = vpow.pop %v927
    %v929 = vadd.f32 %v928, 1.0
    %v930 = vrcp.pop %v929
    %v931 = vmul.f32 1.0, %v930
    %v932 = vxor.u32 %v923, 2147483648
    %v933 = vmul.f32 %v932, 1.442695
    %v934 = vpow.pop %v933
    %v935 = vadd.f32 %v934, 1.0
    %v936 = vrcp.pop %v935
    %v937 = vmul.f32 1.0, %v936
    %v938 = vxor.u32 %v924, 2147483648
    %v939 = vmul.f32 %v938, 1.442695
    %v940 = vpow.pop %v939
    %v941 = vadd.f32 %v940, 1.0
    %v942 = vrcp.pop %v941
    %v943 = vmul.f32 1.0, %v942
    %v944 = vmul.f32 %v925, %v931
    %v945 = vmul.f32 %v776, %v937
    %v946 = vadd.f32 %v944, %v945
    %v947 = vtanh.pop %v946
    %v948 = vmul.f32 %v947, %v943
    %949 = vmatprep.subr.mxu0 %v77
    %950 = vmatpush1.msra.mxu0 %v76
    %951 = vmatprep.subr.mxu0 %v81
    %952 = vmatpush1.msra.mxu0 %v80
    %953 = vmatprep.subr.mxu0 %v85
    %954 = vmatpush1.msra.mxu0 %v84
    %955 = vmatprep.subr.mxu0 %v89
    %956 = vmatpush1.msra.mxu0 %v88
    %957 = vmatprep.subr.mxu0 %v93
    %958 = vmatpush1.msra.mxu0 %v92
    %959 = vmatprep.subr.mxu0 %v97
    %960 = vmatpush1.msra.mxu0 %v96
    %961 = vmatprep.subr.mxu0 %v101
    %962 = vmatpush1.msra.mxu0 %v100
    %963 = vmatprep.subr.mxu0 %v105
    %964 = vmatpush1.msra.mxu0 %v104
    %965 = vmatprep.subr.mxu0 %v109
    %966 = vmatpush1.msra.mxu0 %v108
    %967 = vmatprep.subr.mxu0 %v113
    %968 = vmatpush1.msra.mxu0 %v112
    %969 = vmatprep.subr.mxu0 %v117
    %970 = vmatpush1.msra.mxu0 %v116
    %971 = vmatprep.subr.mxu0 %v121
    %972 = vmatpush1.msra.mxu0 %v120
    %973 = vmatprep.subr.mxu0 %v125
    %974 = vmatpush1.msra.mxu0 %v124
    %975 = vmatprep.subr.mxu0 %v129
    %976 = vmatpush1.msra.mxu0 %v128
    %977 = vmatprep.subr.mxu0 %v133
    %978 = vmatpush1.msra.mxu0 %v132
    %979 = vmatprep.subr.mxu0 %v137
    %980 = vmatpush1.msra.mxu0 %v136
    %981 = vmatprep.subr.mxu0 0.0
    %982 = vmatpush1.msra.mxu0 0.0
    %983 = vmatprep.subr.mxu0 0.0
    %984 = vmatpush1.msra.mxu0 0.0
    %985 = vmatprep.subr.mxu0 0.0
    %986 = vmatpush1.msra.mxu0 0.0
    %987 = vmatprep.subr.mxu0 0.0
    %988 = vmatpush1.msra.mxu0 0.0
    %989 = vmatprep.subr.mxu0 0.0
    %990 = vmatpush1.msra.mxu0 0.0
    %991 = vmatprep.subr.mxu0 0.0
    %992 = vmatpush1.msra.mxu0 0.0
    %993 = vmatprep.subr.mxu0 0.0
    %994 = vmatpush1.msra.mxu0 0.0
    %995 = vmatprep.subr.mxu0 0.0
    %996 = vmatpush1.msra.mxu0 0.0
    %997 = vmatprep.subr.mxu0 0.0
    %998 = vmatpush1.msra.mxu0 0.0
    %999 = vmatprep.subr.mxu0 0.0
    %1000 = vmatpush1.msra.mxu0 0.0
    %1001 = vmatprep.subr.mxu0 0.0
    %1002 = vmatpush1.msra.mxu0 0.0
    %1003 = vmatprep.subr.mxu0 0.0
    %1004 = vmatpush1.msra.mxu0 0.0
    %1005 = vmatprep.subr.mxu0 0.0
    %1006 = vmatpush1.msra.mxu0 0.0
    %1007 = vmatprep.subr.mxu0 0.0
    %1008 = vmatpush1.msra.mxu0 0.0
    %1009 = vmatprep.subr.mxu0 0.0
    %1010 = vmatpush1.msra.mxu0 0.0
    %1011 = vmatprep.subr.mxu0 0.0
    %1012 = vmatpush1.msra.mxu0 0.0
    %1013 = vmatprep.mubr.f32.mxu0 0.0
    %1014 = vmatmul.mubr.f32.gmra.mrb[0].mxu0 %v948
    %v1015 = vpop.f32.mrb[0].mxu0
    %v1016 = vadd.f32 0.0, %v1015
    %v1017 = vpop.f32.mrb[0].mxu0
    %v1018 = vadd.f32 0.0, %v1017
    %1019 = vdwg.mxu0
    %1020 = vmatprep.subr.mxu0 %v79
    %1021 = vmatpush1.msra.mxu0 %v78
    %1022 = vmatprep.subr.mxu0 %v83
    %1023 = vmatpush1.msra.mxu0 %v82
    %1024 = vmatprep.subr.mxu0 %v87
    %1025 = vmatpush1.msra.mxu0 %v86
    %1026 = vmatprep.subr.mxu0 %v91
    %1027 = vmatpush1.msra.mxu0 %v90
    %1028 = vmatprep.subr.mxu0 %v95
    %1029 = vmatpush1.msra.mxu0 %v94
    %1030 = vmatprep.subr.mxu0 %v99
    %1031 = vmatpush1.msra.mxu0 %v98
    %1032 = vmatprep.subr.mxu0 %v103
    %1033 = vmatpush1.msra.mxu0 %v102
    %1034 = vmatprep.subr.mxu0 %v107
    %1035 = vmatpush1.msra.mxu0 %v106
    %1036 = vmatprep.subr.mxu0 %v111
    %1037 = vmatpush1.msra.mxu0 %v110
    %1038 = vmatprep.subr.mxu0 %v115
    %1039 = vmatpush1.msra.mxu0 %v114
    %1040 = vmatprep.subr.mxu0 %v119
    %1041 = vmatpush1.msra.mxu0 %v118
    %1042 = vmatprep.subr.mxu0 %v123
    %1043 = vmatpush1.msra.mxu0 %v122
    %1044 = vmatprep.subr.mxu0 %v127
    %1045 = vmatpush1.msra.mxu0 %v126
    %1046 = vmatprep.subr.mxu0 %v131
    %1047 = vmatpush1.msra.mxu0 %v130
    %1048 = vmatprep.subr.mxu0 %v135
    %1049 = vmatpush1.msra.mxu0 %v134
    %1050 = vmatprep.subr.mxu0 %v139
    %1051 = vmatpush1.msra.mxu0 %v138
    %1052 = vmatprep.subr.mxu0 0.0
    %1053 = vmatpush1.msra.mxu0 0.0
    %1054 = vmatprep.subr.mxu0 0.0
    %1055 = vmatpush1.msra.mxu0 0.0
    %1056 = vmatprep.subr.mxu0 0.0
    %1057 = vmatpush1.msra.mxu0 0.0
    %1058 = vmatprep.subr.mxu0 0.0
    %1059 = vmatpush1.msra.mxu0 0.0
    %1060 = vmatprep.subr.mxu0 0.0
    %1061 = vmatpush1.msra.mxu0 0.0
    %1062 = vmatprep.subr.mxu0 0.0
    %1063 = vmatpush1.msra.mxu0 0.0
    %1064 = vmatprep.subr.mxu0 0.0
    %1065 = vmatpush1.msra.mxu0 0.0
    %1066 = vmatprep.subr.mxu0 0.0
    %1067 = vmatpush1.msra.mxu0 0.0
    %1068 = vmatprep.subr.mxu0 0.0
    %1069 = vmatpush1.msra.mxu0 0.0
    %1070 = vmatprep.subr.mxu0 0.0
    %1071 = vmatpush1.msra.mxu0 0.0
    %1072 = vmatprep.subr.mxu0 0.0
    %1073 = vmatpush1.msra.mxu0 0.0
    %1074 = vmatprep.subr.mxu0 0.0
    %1075 = vmatpush1.msra.mxu0 0.0
    %1076 = vmatprep.subr.mxu0 0.0
    %1077 = vmatpush1.msra.mxu0 0.0
    %1078 = vmatprep.subr.mxu0 0.0
    %1079 = vmatpush1.msra.mxu0 0.0
    %1080 = vmatprep.subr.mxu0 0.0
    %1081 = vmatpush1.msra.mxu0 0.0
    %1082 = vmatprep.subr.mxu0 0.0
    %1083 = vmatpush1.msra.mxu0 0.0
    %1084 = vmatprep.mubr.f32.mxu0 0.0
    %1085 = vmatmul.mubr.f32.gmra.mrb[0].mxu0 %v948
    %v1086 = vpop.f32.mrb[0].mxu0
    %v1087 = vadd.f32 0.0, %v1086
    %v1088 = vpop.f32.mrb[0].mxu0
    %v1089 = vadd.f32 0.0, %v1088
    %1090 = vdwg.mxu0
    %v1091 = vadd.f32 %v241, %v1016
    %v1092 = vadd.f32 %v242, %v1018
    %v1093 = vadd.f32 %v243, %v1087
    %v1094 = vadd.f32 %v244, %v1089
    %v1095 = vtanh.pop %v1091
    %v1096 = vxor.u32 %v1092, 2147483648
    %v1097 = vmul.f32 %v1096, 1.442695
    %v1098 = vpow.pop %v1097
    %v1099 = vadd.f32 %v1098, 1.0
    %v1100 = vrcp.pop %v1099
    %v1101 = vmul.f32 1.0, %v1100
    %v1102 = vxor.u32 %v1093, 2147483648
    %v1103 = vmul.f32 %v1102, 1.442695
    %v1104 = vpow.pop %v1103
    %v1105 = vadd.f32 %v1104, 1.0
    %v1106 = vrcp.pop %v1105
    %v1107 = vmul.f32 1.0, %v1106
    %v1108 = vxor.u32 %v1094, 2147483648
    %v1109 = vmul.f32 %v1108, 1.442695
    %v1110 = vpow.pop %v1109
    %v1111 = vadd.f32 %v1110, 1.0
    %v1112 = vrcp.pop %v1111
    %v1113 = vmul.f32 1.0, %v1112
    %v1114 = vmul.f32 %v1095, %v1101
    %v1115 = vmul.f32 %v946, %v1107
    %v1116 = vadd.f32 %v1114, %v1115
    %v1117 = vtanh.pop %v1116
    %v1118 = vmul.f32 %v1117, %v1113
    %1119 = vmatprep.subr.mxu0 %v77
    %1120 = vmatpush1.msra.mxu0 %v76
    %1121 = vmatprep.subr.mxu0 %v81
    %1122 = vmatpush1.msra.mxu0 %v80
    %1123 = vmatprep.subr.mxu0 %v85
    %1124 = vmatpush1.msra.mxu0 %v84
    %1125 = vmatprep.subr.mxu0 %v89
    %1126 = vmatpush1.msra.mxu0 %v88
    %1127 = vmatprep.subr.mxu0 %v93
    %1128 = vmatpush1.msra.mxu0 %v92
    %1129 = vmatprep.subr.mxu0 %v97
    %1130 = vmatpush1.msra.mxu0 %v96
    %1131 = vmatprep.subr.mxu0 %v101
    %1132 = vmatpush1.msra.mxu0 %v100
    %1133 = vmatprep.subr.mxu0 %v105
    %1134 = vmatpush1.msra.mxu0 %v104
    %1135 = vmatprep.subr.mxu0 %v109
    %1136 = vmatpush1.msra.mxu0 %v108
    %1137 = vmatprep.subr.mxu0 %v113
    %1138 = vmatpush1.msra.mxu0 %v112
    %1139 = vmatprep.subr.mxu0 %v117
    %1140 = vmatpush1.msra.mxu0 %v116
    %1141 = vmatprep.subr.mxu0 %v121
    %1142 = vmatpush1.msra.mxu0 %v120
    %1143 = vmatprep.subr.mxu0 %v125
    %1144 = vmatpush1.msra.mxu0 %v124
    %1145 = vmatprep.subr.mxu0 %v129
    %1146 = vmatpush1.msra.mxu0 %v128
    %1147 = vmatprep.subr.mxu0 %v133
    %1148 = vmatpush1.msra.mxu0 %v132
    %1149 = vmatprep.subr.mxu0 %v137
    %1150 = vmatpush1.msra.mxu0 %v136
    %1151 = vmatprep.subr.mxu0 0.0
    %1152 = vmatpush1.msra.mxu0 0.0
    %1153 = vmatprep.subr.mxu0 0.0
    %1154 = vmatpush1.msra.mxu0 0.0
    %1155 = vmatprep.subr.mxu0 0.0
    %1156 = vmatpush1.msra.mxu0 0.0
    %1157 = vmatprep.subr.mxu0 0.0
    %1158 = vmatpush1.msra.mxu0 0.0
    %1159 = vmatprep.subr.mxu0 0.0
    %1160 = vmatpush1.msra.mxu0 0.0
    %1161 = vmatprep.subr.mxu0 0.0
    %1162 = vmatpush1.msra.mxu0 0.0
    %1163 = vmatprep.subr.mxu0 0.0
    %1164 = vmatpush1.msra.mxu0 0.0
    %1165 = vmatprep.subr.mxu0 0.0
    %1166 = vmatpush1.msra.mxu0 0.0
    %1167 = vmatprep.subr.mxu0 0.0
    %1168 = vmatpush1.msra.mxu0 0.0
    %1169 = vmatprep.subr.mxu0 0.0
    %1170 = vmatpush1.msra.mxu0 0.0
    %1171 = vmatprep.subr.mxu0 0.0
    %1172 = vmatpush1.msra.mxu0 0.0
    %1173 = vmatprep.subr.mxu0 0.0
    %1174 = vmatpush1.msra.mxu0 0.0
    %1175 = vmatprep.subr.mxu0 0.0
    %1176 = vmatpush1.msra.mxu0 0.0
    %1177 = vmatprep.subr.mxu0 0.0
    %1178 = vmatpush1.msra.mxu0 0.0
    %1179 = vmatprep.subr.mxu0 0.0
    %1180 = vmatpush1.msra.mxu0 0.0
    %1181 = vmatprep.subr.mxu0 0.0
    %1182 = vmatpush1.msra.mxu0 0.0
    %1183 = vmatprep.mubr.f32.mxu0 0.0
    %1184 = vmatmul.mubr.f32.gmra.mrb[0].mxu0 %v1118
    %v1185 = vpop.f32.mrb[0].mxu0
    %v1186 = vadd.f32 0.0, %v1185
    %v1187 = vpop.f32.mrb[0].mxu0
    %v1188 = vadd.f32 0.0, %v1187
    %1189 = vdwg.mxu0
    %1190 = vmatprep.subr.mxu0 %v79
    %1191 = vmatpush1.msra.mxu0 %v78
    %1192 = vmatprep.subr.mxu0 %v83
    %1193 = vmatpush1.msra.mxu0 %v82
    %1194 = vmatprep.subr.mxu0 %v87
    %1195 = vmatpush1.msra.mxu0 %v86
    %1196 = vmatprep.subr.mxu0 %v91
    %1197 = vmatpush1.msra.mxu0 %v90
    %1198 = vmatprep.subr.mxu0 %v95
    %1199 = vmatpush1.msra.mxu0 %v94
    %1200 = vmatprep.subr.mxu0 %v99
    %1201 = vmatpush1.msra.mxu0 %v98
    %1202 = vmatprep.subr.mxu0 %v103
    %1203 = vmatpush1.msra.mxu0 %v102
    %1204 = vmatprep.subr.mxu0 %v107
    %1205 = vmatpush1.msra.mxu0 %v106
    %1206 = vmatprep.subr.mxu0 %v111
    %1207 = vmatpush1.msra.mxu0 %v110
    %1208 = vmatprep.subr.mxu0 %v115
    %1209 = vmatpush1.msra.mxu0 %v114
    %1210 = vmatprep.subr.mxu0 %v119
    %1211 = vmatpush1.msra.mxu0 %v118
    %1212 = vmatprep.subr.mxu0 %v123
    %1213 = vmatpush1.msra.mxu0 %v122
    %1214 = vmatprep.subr.mxu0 %v127
    %1215 = vmatpush1.msra.mxu0 %v126
    %1216 = vmatprep.subr.mxu0 %v131
    %1217 = vmatpush1.msra.mxu0 %v130
    %1218 = vmatprep.subr.mxu0 %v135
    %1219 = vmatpush1.msra.mxu0 %v134
    %1220 = vmatprep.subr.mxu0 %v139
    %1221 = vmatpush1.msra.mxu0 %v138
    %1222 = vmatprep.subr.mxu0 0.0
    %1223 = vmatpush1.msra.mxu0 0.0
    %1224 = vmatprep.subr.mxu0 0.0
    %1225 = vmatpush1.msra.mxu0 0.0
    %1226 = vmatprep.subr.mxu0 0.0
    %1227 = vmatpush1.msra.mxu0 0.0
    %1228 = vmatprep.subr.mxu0 0.0
    %1229 = vmatpush1.msra.mxu0 0.0
    %1230 = vmatprep.subr.mxu0 0.0
    %1231 = vmatpush1.msra.mxu0 0.0
    %1232 = vmatprep.subr.mxu0 0.0
    %1233 = vmatpush1.msra.mxu0 0.0
    %1234 = vmatprep.subr.mxu0 0.0
    %1235 = vmatpush1.msra.mxu0 0.0
    %1236 = vmatprep.subr.mxu0 0.0
    %1237 = vmatpush1.msra.mxu0 0.0
    %1238 = vmatprep.subr.mxu0 0.0
    %1239 = vmatpush1.msra.mxu0 0.0
    %1240 = vmatprep.subr.mxu0 0.0
    %1241 = vmatpush1.msra.mxu0 0.0
    %1242 = vmatprep.subr.mxu0 0.0
    %1243 = vmatpush1.msra.mxu0 0.0
    %1244 = vmatprep.subr.mxu0 0.0
    %1245 = vmatpush1.msra.mxu0 0.0
    %1246 = vmatprep.subr.mxu0 0.0
    %1247 = vmatpush1.msra.mxu0 0.0
    %1248 = vmatprep.subr.mxu0 0.0
    %1249 = vmatpush1.msra.mxu0 0.0
    %1250 = vmatprep.subr.mxu0 0.0
    %1251 = vmatpush1.msra.mxu0 0.0
    %1252 = vmatprep.subr.mxu0 0.0
    %1253 = vmatpush1.msra.mxu0 0.0
    %1254 = vmatprep.mubr.f32.mxu0 0.0
    %1255 = vmatmul.mubr.f32.gmra.mrb[0].mxu0 %v1118
    %v1256 = vpop.f32.mrb[0].mxu0
    %v1257 = vadd.f32 0.0, %v1256
    %v1258 = vpop.f32.mrb[0].mxu0
    %v1259 = vadd.f32 0.0, %v1258
    %1260 = vdwg.mxu0
    %v1261 = vadd.f32 %v253, %v1186
    %v1262 = vadd.f32 %v254, %v1188
    %v1263 = vadd.f32 %v255, %v1257
    %v1264 = vadd.f32 %v256, %v1259
    %v1265 = vtanh.pop %v1261
    %v1266 = vxor.u32 %v1262, 2147483648
    %v1267 = vmul.f32 %v1266, 1.442695
    %v1268 = vpow.pop %v1267
    %v1269 = vadd.f32 %v1268, 1.0
    %v1270 = vrcp.pop %v1269
    %v1271 = vmul.f32 1.0, %v1270
    %v1272 = vxor.u32 %v1263, 2147483648
    %v1273 = vmul.f32 %v1272, 1.442695
    %v1274 = vpow.pop %v1273
    %v1275 = vadd.f32 %v1274, 1.0
    %v1276 = vrcp.pop %v1275
    %v1277 = vmul.f32 1.0, %v1276
    %v1278 = vxor.u32 %v1264, 2147483648
    %v1279 = vmul.f32 %v1278, 1.442695
    %v1280 = vpow.pop %v1279
    %v1281 = vadd.f32 %v1280, 1.0
    %v1282 = vrcp.pop %v1281
    %v1283 = vmul.f32 1.0, %v1282
    %v1284 = vmul.f32 %v1265, %v1271
    %v1285 = vmul.f32 %v1116, %v1277
    %v1286 = vadd.f32 %v1284, %v1285
    %v1287 = vtanh.pop %v1286
    %v1288 = vmul.f32 %v1287, %v1283
    %1289 = vmatprep.subr.mxu0 %v77
    %1290 = vmatpush1.msra.mxu0 %v76
    %1291 = vmatprep.subr.mxu0 %v81
    %1292 = vmatpush1.msra.mxu0 %v80
    %1293 = vmatprep.subr.mxu0 %v85
    %1294 = vmatpush1.msra.mxu0 %v84
    %1295 = vmatprep.subr.mxu0 %v89
    %1296 = vmatpush1.msra.mxu0 %v88
    %1297 = vmatprep.subr.mxu0 %v93
    %1298 = vmatpush1.msra.mxu0 %v92
    %1299 = vmatprep.subr.mxu0 %v97
    %1300 = vmatpush1.msra.mxu0 %v96
    %1301 = vmatprep.subr.mxu0 %v101
    %1302 = vmatpush1.msra.mxu0 %v100
    %1303 = vmatprep.subr.mxu0 %v105
    %1304 = vmatpush1.msra.mxu0 %v104
    %1305 = vmatprep.subr.mxu0 %v109
    %1306 = vmatpush1.msra.mxu0 %v108
    %1307 = vmatprep.subr.mxu0 %v113
    %1308 = vmatpush1.msra.mxu0 %v112
    %1309 = vmatprep.subr.mxu0 %v117
    %1310 = vmatpush1.msra.mxu0 %v116
    %1311 = vmatprep.subr.mxu0 %v121
    %1312 = vmatpush1.msra.mxu0 %v120
    %1313 = vmatprep.subr.mxu0 %v125
    %1314 = vmatpush1.msra.mxu0 %v124
    %1315 = vmatprep.subr.mxu0 %v129
    %1316 = vmatpush1.msra.mxu0 %v128
    %1317 = vmatprep.subr.mxu0 %v133
    %1318 = vmatpush1.msra.mxu0 %v132
    %1319 = vmatprep.subr.mxu0 %v137
    %1320 = vmatpush1.msra.mxu0 %v136
    %1321 = vmatprep.subr.mxu0 0.0
    %1322 = vmatpush1.msra.mxu0 0.0
    %1323 = vmatprep.subr.mxu0 0.0
    %1324 = vmatpush1.msra.mxu0 0.0
    %1325 = vmatprep.subr.mxu0 0.0
    %1326 = vmatpush1.msra.mxu0 0.0
    %1327 = vmatprep.subr.mxu0 0.0
    %1328 = vmatpush1.msra.mxu0 0.0
    %1329 = vmatprep.subr.mxu0 0.0
    %1330 = vmatpush1.msra.mxu0 0.0
    %1331 = vmatprep.subr.mxu0 0.0
    %1332 = vmatpush1.msra.mxu0 0.0
    %1333 = vmatprep.subr.mxu0 0.0
    %1334 = vmatpush1.msra.mxu0 0.0
    %1335 = vmatprep.subr.mxu0 0.0
    %1336 = vmatpush1.msra.mxu0 0.0
    %1337 = vmatprep.subr.mxu0 0.0
    %1338 = vmatpush1.msra.mxu0 0.0
    %1339 = vmatprep.subr.mxu0 0.0
    %1340 = vmatpush1.msra.mxu0 0.0
    %1341 = vmatprep.subr.mxu0 0.0
    %1342 = vmatpush1.msra.mxu0 0.0
    %1343 = vmatprep.subr.mxu0 0.0
    %1344 = vmatpush1.msra.mxu0 0.0
    %1345 = vmatprep.subr.mxu0 0.0
    %1346 = vmatpush1.msra.mxu0 0.0
    %1347 = vmatprep.subr.mxu0 0.0
    %1348 = vmatpush1.msra.mxu0 0.0
    %1349 = vmatprep.subr.mxu0 0.0
    %1350 = vmatpush1.msra.mxu0 0.0
    %1351 = vmatprep.subr.mxu0 0.0
    %1352 = vmatpush1.msra.mxu0 0.0
    %1353 = vmatprep.mubr.f32.mxu0 0.0
    %1354 = vmatmul.mubr.f32.gmra.mrb[0].mxu0 %v1288
    %v1355 = vpop.f32.mrb[0].mxu0
    %v1356 = vadd.f32 0.0, %v1355
    %v1357 = vpop.f32.mrb[0].mxu0
    %v1358 = vadd.f32 0.0, %v1357
    %1359 = vdwg.mxu0
    %1360 = vmatprep.subr.mxu0 %v79
    %1361 = vmatpush1.msra.mxu0 %v78
    %1362 = vmatprep.subr.mxu0 %v83
    %1363 = vmatpush1.msra.mxu0 %v82
    %1364 = vmatprep.subr.mxu0 %v87
    %1365 = vmatpush1.msra.mxu0 %v86
    %1366 = vmatprep.subr.mxu0 %v91
    %1367 = vmatpush1.msra.mxu0 %v90
    %1368 = vmatprep.subr.mxu0 %v95
    %1369 = vmatpush1.msra.mxu0 %v94
    %1370 = vmatprep.subr.mxu0 %v99
    %1371 = vmatpush1.msra.mxu0 %v98
    %1372 = vmatprep.subr.mxu0 %v103
    %1373 = vmatpush1.msra.mxu0 %v102
    %1374 = vmatprep.subr.mxu0 %v107
    %1375 = vmatpush1.msra.mxu0 %v106
    %1376 = vmatprep.subr.mxu0 %v111
    %1377 = vmatpush1.msra.mxu0 %v110
    %1378 = vmatprep.subr.mxu0 %v115
    %1379 = vmatpush1.msra.mxu0 %v114
    %1380 = vmatprep.subr.mxu0 %v119
    %1381 = vmatpush1.msra.mxu0 %v118
    %1382 = vmatprep.subr.mxu0 %v123
    %1383 = vmatpush1.msra.mxu0 %v122
    %1384 = vmatprep.subr.mxu0 %v127
    %1385 = vmatpush1.msra.mxu0 %v126
    %1386 = vmatprep.subr.mxu0 %v131
    %1387 = vmatpush1.msra.mxu0 %v130
    %1388 = vmatprep.subr.mxu0 %v135
    %1389 = vmatpush1.msra.mxu0 %v134
    %1390 = vmatprep.subr.mxu0 %v139
    %1391 = vmatpush1.msra.mxu0 %v138
    %1392 = vmatprep.subr.mxu0 0.0
    %1393 = vmatpush1.msra.mxu0 0.0
    %1394 = vmatprep.subr.mxu0 0.0
    %1395 = vmatpush1.msra.mxu0 0.0
    %1396 = vmatprep.subr.mxu0 0.0
    %1397 = vmatpush1.msra.mxu0 0.0
    %1398 = vmatprep.subr.mxu0 0.0
    %1399 = vmatpush1.msra.mxu0 0.0
    %1400 = vmatprep.subr.mxu0 0.0
    %1401 = vmatpush1.msra.mxu0 0.0
    %1402 = vmatprep.subr.mxu0 0.0
    %1403 = vmatpush1.msra.mxu0 0.0
    %1404 = vmatprep.subr.mxu0 0.0
    %1405 = vmatpush1.msra.mxu0 0.0
    %1406 = vmatprep.subr.mxu0 0.0
    %1407 = vmatpush1.msra.mxu0 0.0
    %1408 = vmatprep.subr.mxu0 0.0
    %1409 = vmatpush1.msra.mxu0 0.0
    %1410 = vmatprep.subr.mxu0 0.0
    %1411 = vmatpush1.msra.mxu0 0.0
    %1412 = vmatprep.subr.mxu0 0.0
    %1413 = vmatpush1.msra.mxu0 0.0
    %1414 = vmatprep.subr.mxu0 0.0
    %1415 = vmatpush1.msra.mxu0 0.0
    %1416 = vmatprep.subr.mxu0 0.0
    %1417 = vmatpush1.msra.mxu0 0.0
    %1418 = vmatprep.subr.mxu0 0.0
    %1419 = vmatpush1.msra.mxu0 0.0
    %1420 = vmatprep.subr.mxu0 0.0
    %1421 = vmatpush1.msra.mxu0 0.0
    %1422 = vmatprep.subr.mxu0 0.0
    %1423 = vmatpush1.msra.mxu0 0.0
    %1424 = vmatprep.mubr.f32.mxu0 0.0
    %1425 = vmatmul.mubr.f32.gmra.mrb[0].mxu0 %v1288
    %v1426 = vpop.f32.mrb[0].mxu0
    %v1427 = vadd.f32 0.0, %v1426
    %v1428 = vpop.f32.mrb[0].mxu0
    %v1429 = vadd.f32 0.0, %v1428
    %1430 = vdwg.mxu0
    %v1431 = vadd.f32 %v265, %v1356
    %v1432 = vadd.f32 %v266, %v1358
    %v1433 = vadd.f32 %v267, %v1427
    %v1434 = vadd.f32 %v268, %v1429
    %v1435 = vtanh.pop %v1431
    %v1436 = vxor.u32 %v1432, 2147483648
    %v1437 = vmul.f32 %v1436, 1.442695
    %v1438 = vpow.pop %v1437
    %v1439 = vadd.f32 %v1438, 1.0
    %v1440 = vrcp.pop %v1439
    %v1441 = vmul.f32 1.0, %v1440
    %v1442 = vxor.u32 %v1433, 2147483648
    %v1443 = vmul.f32 %v1442, 1.442695
    %v1444 = vpow.pop %v1443
    %v1445 = vadd.f32 %v1444, 1.0
    %v1446 = vrcp.pop %v1445
    %v1447 = vmul.f32 1.0, %v1446
    %v1448 = vxor.u32 %v1434, 2147483648
    %v1449 = vmul.f32 %v1448, 1.442695
    %v1450 = vpow.pop %v1449
    %v1451 = vadd.f32 %v1450, 1.0
    %v1452 = vrcp.pop %v1451
    %v1453 = vmul.f32 1.0, %v1452
    %v1454 = vmul.f32 %v1435, %v1441
    %v1455 = vmul.f32 %v1286, %v1447
    %v1456 = vadd.f32 %v1454, %v1455
    %v1457 = vtanh.pop %v1456
    %v1458 = vmul.f32 %v1457, %v1453
    %v1459 = vld [vmem:[#allocation8] sm:$0xff]
    %v1460 = vld [vmem:[#allocation8 + $0x8] sm:$0xff]
    %v1461 = vld [vmem:[#allocation8 + $0x10] sm:$0xff]
    %v1462 = vld [vmem:[#allocation8 + $0x18] sm:$0xff]
    %v1463 = vld [vmem:[#allocation8 + $0x20] sm:$0xff]
    %v1464 = vld [vmem:[#allocation8 + $0x28] sm:$0xff]
    %v1465 = vld [vmem:[#allocation8 + $0x30] sm:$0xff]
    %v1466 = vld [vmem:[#allocation8 + $0x38] sm:$0xff]
    %v1467 = vld [vmem:[#allocation8 + $0x40] sm:$0xff]
    %v1468 = vld [vmem:[#allocation8 + $0x48] sm:$0xff]
    %v1469 = vld [vmem:[#allocation8 + $0x50] sm:$0xff]
    %v1470 = vld [vmem:[#allocation8 + $0x58] sm:$0xff]
    %v1471 = vld [vmem:[#allocation8 + $0x60] sm:$0xff]
    %v1472 = vld [vmem:[#allocation8 + $0x68] sm:$0xff]
    %v1473 = vld [vmem:[#allocation8 + $0x70] sm:$0xff]
    %v1474 = vld [vmem:[#allocation8 + $0x78] sm:$0xff]
    %v1475 = vld [vmem:[%s5] sm:$0x1]
    %v1477 = vlaneseq
    %v1478 = vshrl.u32 %v1477, 7
    %v1479 = vsub.s32 0, %v1478
    %v1480 = vrot.slane %v1475, %v1479
    %1482 = vmatprep.subr.mxu0 0.0
    %1483 = vmatpush1.msra.mxu0 %v1459
    %1484 = vmatprep.subr.mxu0 0.0
    %1485 = vmatpush1.msra.mxu0 %v1460
    %1486 = vmatprep.subr.mxu0 0.0
    %1487 = vmatpush1.msra.mxu0 %v1461
    %1488 = vmatprep.subr.mxu0 0.0
    %1489 = vmatpush1.msra.mxu0 %v1462
    %1490 = vmatprep.subr.mxu0 0.0
    %1491 = vmatpush1.msra.mxu0 %v1463
    %1492 = vmatprep.subr.mxu0 0.0
    %1493 = vmatpush1.msra.mxu0 %v1464
    %1494 = vmatprep.subr.mxu0 0.0
    %1495 = vmatpush1.msra.mxu0 %v1465
    %1496 = vmatprep.subr.mxu0 0.0
    %1497 = vmatpush1.msra.mxu0 %v1466
    %1498 = vmatprep.subr.mxu0 0.0
    %1499 = vmatpush1.msra.mxu0 %v1467
    %1500 = vmatprep.subr.mxu0 0.0
    %1501 = vmatpush1.msra.mxu0 %v1468
    %1502 = vmatprep.subr.mxu0 0.0
    %1503 = vmatpush1.msra.mxu0 %v1469
    %1504 = vmatprep.subr.mxu0 0.0
    %1505 = vmatpush1.msra.mxu0 %v1470
    %1506 = vmatprep.subr.mxu0 0.0
    %1507 = vmatpush1.msra.mxu0 %v1471
    %1508 = vmatprep.subr.mxu0 0.0
    %1509 = vmatpush1.msra.mxu0 %v1472
    %1510 = vmatprep.subr.mxu0 0.0
    %1511 = vmatpush1.msra.mxu0 %v1473
    %1512 = vmatprep.subr.mxu0 0.0
    %1513 = vmatpush1.msra.mxu0 %v1474
    %1514 = vmatprep.subr.mxu0 0.0
    %1515 = vmatpush1.msra.mxu0 0.0
    %1516 = vmatprep.subr.mxu0 0.0
    %1517 = vmatpush1.msra.mxu0 0.0
    %1518 = vmatprep.subr.mxu0 0.0
    %1519 = vmatpush1.msra.mxu0 0.0
    %1520 = vmatprep.subr.mxu0 0.0
    %1521 = vmatpush1.msra.mxu0 0.0
    %1522 = vmatprep.subr.mxu0 0.0
    %1523 = vmatpush1.msra.mxu0 0.0
    %1524 = vmatprep.subr.mxu0 0.0
    %1525 = vmatpush1.msra.mxu0 0.0
    %1526 = vmatprep.subr.mxu0 0.0
    %1527 = vmatpush1.msra.mxu0 0.0
    %1528 = vmatprep.subr.mxu0 0.0
    %1529 = vmatpush1.msra.mxu0 0.0
    %1530 = vmatprep.subr.mxu0 0.0
    %1531 = vmatpush1.msra.mxu0 0.0
    %1532 = vmatprep.subr.mxu0 0.0
    %1533 = vmatpush1.msra.mxu0 0.0
    %1534 = vmatprep.subr.mxu0 0.0
    %1535 = vmatpush1.msra.mxu0 0.0
    %1536 = vmatprep.subr.mxu0 0.0
    %1537 = vmatpush1.msra.mxu0 0.0
    %1538 = vmatprep.subr.mxu0 0.0
    %1539 = vmatpush1.msra.mxu0 0.0
    %1540 = vmatprep.subr.mxu0 0.0
    %1541 = vmatpush1.msra.mxu0 0.0
    %1542 = vmatprep.subr.mxu0 0.0
    %1543 = vmatpush1.msra.mxu0 0.0
    %1544 = vmatprep.subr.mxu0 0.0
    %1545 = vmatpush1.msra.mxu0 0.0
    %1546 = vmatprep.mubr.f32.mxu0 0.0
    %1547 = vmatmul.mubr.f32.gmra.mrb[0].mxu0 %v1458
    %v1548 = vpop.f32.mrb[0].mxu0
    %v1549 = vadd.f32 %v1480, %v1548
    %v1550 = vpop.f32.mrb[0].mxu0
    %1551 = vdwg.mxu0
    %1552 = vst [vmem:[#allocation10] sm:$0xff] %v1549
    // Predicated region
    $region42: #{tpu_custom_call.1} parent=1 // pred_check
      _
    $region43: #{tpu_custom_call.1} parent=1 // pred_check_branch
      %1554 = sbr.rel (0) target = $region45
    $region44: #{tpu_custom_call.1} parent=1 // pred_region
      %s1556 = ssub.s32 128, 128
      %1557 = vsyncadd [#allocation4], %s1556
      %s1559 = sshll.u32 [#allocation10], 4
      %s1560 = int_to_ptr.vmem [resolvable:$true] %s1559
      %1562 = dma.vmem_to_hbm [thread:$0]  %s1560, 128, %s6, [#allocation4]
    $region45: #{tpu_custom_call.1} parent=1 // pred_fallthru
      _
    // Predicated region
    $region46: #{tpu_custom_call.1} parent=1 // pred_check
      _
    $region47: #{tpu_custom_call.1} parent=1 // pred_check_branch
      %1564 = sbr.rel (0) target = $region49
    $region48: #{tpu_custom_call.1} parent=1 // pred_region
      %1565 = dma.done [#allocation4], 128
    $region49: #{tpu_custom_call.1} parent=1 // pred_fallthru
      _
    %1566 = vsyncpa [#allocation3], 1
    %1567 = vsyncpa [#allocation6], 1
    %1568 = vsyncpa [#allocation9], 1
    %1569 = vsyncpa [#allocation4], 1

</llo_original>
